<compile_context>
chip_gen: v5e
topology: v5e:2x2
jax: 0.10.0
libtpu: 0.0.40
codegen_flags: <defaults>
</compile_context>

<pallas_src>
import jax
import jax.numpy as jnp
from jax.experimental import pallas as pl
from jax.experimental.pallas import tpu as pltpu


def _cdiv(a, b):
    return -(-a // b)


def _round_up(v, mult):
    return _cdiv(v, mult) * mult


def _vmem_capacity_bytes():
    try:
        cap = int(pltpu.get_tpu_info().vmem_capacity_bytes)
        if cap > 0:
            return cap
    except Exception:
        pass
    return 64 * 1024 * 1024  # conservative default (v7x per-core VMEM)


def _vmem_estimate(tr, wq, wo, c4, c_mid, c_out_pad):
    """Per-grid-step VMEM footprint (pipeline buffers + in-kernel values)."""
    bf, f4 = 2, 4
    c = max(1, c4 // 4)
    m = tr * wo
    main_blk = tr * wq * c4 * bf
    halo_blk = wq * c4 * bf
    out_blk = tr * wo * c_out_pad * f4
    weights = (9 * c * c_mid + c_mid * c_out_pad) * bf + (c_mid + c_out_pad) * f4
    pipeline = 2 * (main_blk + halo_blk + out_blk + weights)  # double buffers
    interm = (2 * main_blk               # xm load + shifted-row concat
              + m * 9 * c * bf           # matmul operand slices/reshapes
              + 2 * m * c_mid * f4       # f32 accumulator + post-ReLU feat
              + m * c_mid * bf           # bf16 cast of feat for 2nd matmul
              + m * c_out_pad * f4)      # semi before store
    return pipeline + interm + (4 << 20)  # Mosaic internal scratch margin


def _pick_row_tile(n, ho, wo, wq, c4, c_mid, c_out_pad, vmem_budget,
                   target_m=2048, min_steps=4):
    """Pick output rows per tile: big flattened-M, VMEM-safe, >=4 grid steps."""
    tr = max(1, min(ho, target_m // max(wo, 1)))
    while tr > 1 and _vmem_estimate(tr, wq, wo, c4, c_mid, c_out_pad) > vmem_budget:
        tr -= 1
    # Keep >= min_steps grid steps when possible so the two v7x TensorCores
    # each get >= 2 steps (input DMA overlaps compute), but never shrink the
    # flattened matmul M below ~128 rows.
    floor_tr = max(1, min(tr, _cdiv(128, max(wo, 1))))
    for cand in range(tr, floor_tr - 1, -1):
        if n * _cdiv(ho, cand) >= min_steps:
            return cand
    return tr


# ----------------------------- Pallas kernel ------------------------------ #
def _decoder_kernel(xm_ref, xh_ref, w_a_ref, w_b1_ref, w_b2_ref, w_c_ref,
                    w_d_ref, b1_ref, w2_ref, b2_ref, out_ref):
    """One (image, output-row-tile) step: 3x3/s2 conv + ReLU + 1x1 conv.

    xm_ref : (1, TR, Wq, 4C) bf16  space-to-depth rows qr in [oy0, oy0+TR)
    xh_ref : (1, 1,  Wq, 4C) bf16  halo row qr = oy0+TR (for the dy=2 taps)
    w_*    : first-conv weight slices in matmul layout (see wrapper)
    b1_ref : (1, 256) f32     w2_ref: (256, 128) bf16     b2_ref: (1, 128) f32
    out_ref: (1, TR, Wo, 128) f32 (channels 65..127 are padding)
    """
    tr = xm_ref.shape[1]
    wq = xm_ref.shape[2]
    c4 = xm_ref.shape[3]
    c = c4 // 4
    wo = out_ref.shape[2]
    m = tr * wo
    f32 = jnp.float32

    xm = xm_ref[0]                                     # (TR, Wq, 4C)
    xh = xh_ref[0]                                     # (1,  Wq, 4C)
    # Rows shifted down by one output row (qr = oy+1): needed by dy=2 taps.
    if tr > 1:
        xs = jnp.concatenate([xm[1:], xh], axis=0)     # (TR, Wq, 4C)
    else:
        xs = xh

    # First conv as 5 matmuls over contiguous (row, col, channel) slices:
    #   s2d channel layout is (row_parity pr, col_parity pc, Cin).
    # taps (dy,dx) in {0,1}x{0,1}: same s2d cell, all four parity blocks
    a_op = xm[:, :wo, :].reshape(m, c4)
    acc = jnp.dot(a_op, w_a_ref[...], preferred_element_type=f32)
    # tap (0,2): cell (oy, ox+1), parity block (pr=0, pc=0)
    b1_op = xm[:, 1:wo + 1, 0:c].reshape(m, c)
    acc += jnp.dot(b1_op, w_b1_ref[...], preferred_element_type=f32)
    # tap (1,2): cell (oy, ox+1), parity block (pr=1, pc=0)
    b2_op = xm[:, 1:wo + 1, 2 * c:3 * c].reshape(m, c)
    acc += jnp.dot(b2_op, w_b2_ref[...], preferred_element_type=f32)
    # taps (2,0),(2,1): cell (oy+1, ox), parity blocks (pr=0, pc in {0,1})
    c_op = xs[:, :wo, 0:2 * c].reshape(m, 2 * c)
    acc += jnp.dot(c_op, w_c_ref[...], preferred_element_type=f32)
    # tap (2,2): cell (oy+1, ox+1), parity block (pr=0, pc=0)
    d_op = xs[:, 1:wo + 1, 0:c].reshape(m, c)
    acc += jnp.dot(d_op, w_d_ref[...], preferred_element_type=f32)

    feat = jnp.maximum(acc + b1_ref[...], 0.0)          # bias + ReLU in f32
    semi = jnp.dot(feat.astype(w2_ref.dtype), w2_ref[...],
                   preferred_element_type=f32) + b2_ref[...]
    out_ref[...] = semi.reshape(1, tr, wo, out_ref.shape[3]).astype(out_ref.dtype)


# ------------------------------- Wrapper ----------------------------------- #
def superpoint_decoder_forward(x_nchw, params, *, row_tile=None,
                               compute_dtype=jnp.bfloat16,
                               out_dtype=jnp.float32):
    """Forward pass of SuperpointDecoder (backbone='lcnn').

    x_nchw: (N, Cin, H, W) float32
    params: dict with
        convPa_w: (256, Cin, 3, 3), convPa_b: (256,)
        convPb_w: (65, 256, 1, 1),  convPb_b: (65,)
    returns: (N, 65, Ho, Wo) with Ho/Wo from the stride-2, pad-1, k=3 conv.

    Note: matmuls run in `compute_dtype` (bf16 default) with f32 accumulation.
    """
    n, cin, h, w = x_nchw.shape
    ho = (h - 1) // 2 + 1
    wo = (w - 1) // 2 + 1

    c_mid = params["convPa_w"].shape[0]          # 256
    c_out = params["convPb_w"].shape[0]          # 65
    c_out_pad = _round_up(c_out, 128)            # lane-dense, unmasked stores
    c4 = 4 * cin
    wq = wo + 1                                  # s2d columns (incl. +1 halo)

    # ---- generation-aware VMEM policy ----
    vmem_cap = _vmem_capacity_bytes()
    vmem_budget = max(16 << 20, int(0.45 * vmem_cap))
    vmem_limit = max(32 << 20, min(int(0.75 * vmem_cap), 100 << 20))

    # ---- tiling over output rows ----
    if row_tile is None:
        tr = _pick_row_tile(n, ho, wo, wq, c4, c_mid, c_out_pad, vmem_budget)
    else:
        tr = int(row_tile)
    tr = max(1, min(tr, ho))
    n_tiles = _cdiv(ho, tr)
    tr = _cdiv(ho, n_tiles)                      # balance the last tile
    n_tiles = _cdiv(ho, tr)
    hq = n_tiles * tr + 1                        # s2d rows (incl. +1 halo)

    # ---- glue: pad + space-to-depth (single transpose pass, bf16) ----
    hp = 2 * hq
    wp = 2 * wq
    xb = x_nchw.astype(compute_dtype)            # cast before transpose
    xp = jnp.pad(xb, ((0, 0), (0, 0), (1, hp - 1 - h), (1, wp - 1 - w)))
    x_s2d = xp.reshape(n, cin, hq, 2, wq, 2)
    # -> (N, Hq, Wq, pr, pc, Cin) -> (N, Hq, Wq, 4*Cin), channel = (pr,pc,Cin)
    x_s2d = jnp.transpose(x_s2d, (0, 2, 4, 3, 5, 1)).reshape(n, hq, wq, c4)

    # ---- weights: PyTorch conv layouts -> matmul slices ----
    w1 = params["convPa_w"].astype(jnp.float32)              # (256, Cin, 3, 3)
    # taps (dy,dx) in {0,1}x{0,1}: rows ordered ((pr*2+pc)*Cin + c)
    w_a = jnp.transpose(w1[:, :, 0:2, 0:2], (2, 3, 1, 0)).reshape(c4, c_mid)
    w_b1 = jnp.transpose(w1[:, :, 0, 2], (1, 0))              # tap (0,2)
    w_b2 = jnp.transpose(w1[:, :, 1, 2], (1, 0))              # tap (1,2)
    w_c = jnp.transpose(w1[:, :, 2, 0:2], (2, 1, 0)).reshape(2 * cin, c_mid)
    w_d = jnp.transpose(w1[:, :, 2, 2], (1, 0))               # tap (2,2)
    w_a, w_b1, w_b2, w_c, w_d = (m.astype(compute_dtype)
                                 for m in (w_a, w_b1, w_b2, w_c, w_d))
    b1 = params["convPa_b"].reshape(1, c_mid).astype(jnp.float32)
    w2 = jnp.transpose(params["convPb_w"][:, :, 0, 0], (1, 0))  # (256, 65)
    w2 = jnp.pad(w2, ((0, 0), (0, c_out_pad - c_out))).astype(compute_dtype)
    b2 = jnp.pad(params["convPb_b"], (0, c_out_pad - c_out))
    b2 = b2.reshape(1, c_out_pad).astype(jnp.float32)

    const2 = lambda ni, ti: (0, 0)
    out = pl.pallas_call(
        _decoder_kernel,
        out_shape=jax.ShapeDtypeStruct((n, n_tiles * tr, wo, c_out_pad),
                                       out_dtype),
        grid_spec=pltpu.PrefetchScalarGridSpec(
            num_scalar_prefetch=0,
            grid=(n, n_tiles),
            in_specs=[
                # main s2d row block for this tile
                pl.BlockSpec((1, tr, wq, c4), lambda ni, ti: (ni, ti, 0, 0)),
                # one-row halo (same array, block size 1 along rows)
                pl.BlockSpec((1, 1, wq, c4),
                             lambda ni, ti: (ni, (ti + 1) * tr, 0, 0)),
                pl.BlockSpec((c4, c_mid), const2),
                pl.BlockSpec((cin, c_mid), const2),
                pl.BlockSpec((cin, c_mid), const2),
                pl.BlockSpec((2 * cin, c_mid), const2),
                pl.BlockSpec((cin, c_mid), const2),
                pl.BlockSpec((1, c_mid), const2),
                pl.BlockSpec((c_mid, c_out_pad), const2),
                pl.BlockSpec((1, c_out_pad), const2),
            ],
            out_specs=pl.BlockSpec((1, tr, wo, c_out_pad),
                                   lambda ni, ti: (ni, ti, 0, 0)),
        ),
        compiler_params=pltpu.CompilerParams(
            dimension_semantics=("parallel", "parallel"),
            vmem_limit_bytes=vmem_limit,
        ),
    )(x_s2d, x_s2d, w_a, w_b1, w_b2, w_c, w_d, b1, w2, b2)

    semi = out[:, :ho, :, :c_out]
    # TODO(synk): NHWC consumers can take `semi` directly and skip this pass.
    return jnp.transpose(semi, (0, 3, 1, 2))                   # back to NCHW


# --------------------------- Reference (pure JAX) --------------------------- #
def _reference_forward(x_nchw, params, matmul_dtype=jnp.float32):
    """Reference conv path; matmul_dtype=bf16 mirrors the kernel's MXU inputs."""
    dn = jax.lax.conv_dimension_numbers(x_nchw.shape,
                                        params["convPa_w"].shape,
                                        ("NCHW", "OIHW", "NCHW"))
    feat = jax.lax.conv_general_dilated(
        x_nchw.astype(matmul_dtype), params["convPa_w"].astype(matmul_dtype),
        window_strides=(2, 2), padding=((1, 1), (1, 1)),
        dimension_numbers=dn, preferred_element_type=jnp.float32)
    feat = jnp.maximum(feat + params["convPa_b"][None, :, None, None], 0.0)
    dn2 = jax.lax.conv_dimension_numbers(feat.shape,
                                         params["convPb_w"].shape,
                                         ("NCHW", "OIHW", "NCHW"))
    semi = jax.lax.conv_general_dilated(
        feat.astype(matmul_dtype), params["convPb_w"].astype(matmul_dtype),
        window_strides=(1, 1), padding=((0, 0), (0, 0)),
        dimension_numbers=dn2, preferred_element_type=jnp.float32)
    return semi + params["convPb_b"][None, :, None, None]


# ----------------------------------- Main ----------------------------------- #
if __name__ == "__main__":
    key = jax.random.PRNGKey(0)
    k_x, k_w1, k_b1, k_w2, k_b2 = jax.random.split(key, 5)

    # Small shapes consistent with the module (input_feat_dim scaled down).
    N, CIN, H, W = 2, 8, 16, 16
    x = jax.random.normal(k_x, (N, CIN, H, W), dtype=jnp.float32)

    params = {
        "convPa_w": 0.1 * jax.random.normal(k_w1, (256, CIN, 3, 3), jnp.float32),
        "convPa_b": 0.1 * jax.random.normal(k_b1, (256,), jnp.float32),
        "convPb_w": 0.1 * jax.random.normal(k_w2, (65, 256, 1, 1), jnp.float32),
        "convPb_b": 0.1 * jax.random.normal(k_b2, (65,), jnp.float32),
    }

    fwd = jax.jit(superpoint_decoder_forward)
    semi = fwd(x, params)
    jax.block_until_ready(semi)

    # sanity vs a reference that uses the same bf16 MXU inputs / f32 accumulate
    ref = _reference_forward(x, params, matmul_dtype=jnp.bfloat16)
    assert semi.shape == (N, 65, H // 2, W // 2), semi.shape
    max_err = float(jnp.max(jnp.abs(semi - ref)))
    assert jnp.allclose(semi, ref, atol=2e-2, rtol=2e-2), max_err

    print("KERNEL_OK")
</pallas_src>

<mosaic_0001>
module attributes {stable_mosaic.version = 11 : i64} {
  func.func @_decoder_kernel(%arg0: i32, %arg1: i32, %arg2: memref<1x8x9x32xbf16, #tpu.memory_space<vmem>>, %arg3: memref<1x1x9x32xbf16, #tpu.memory_space<vmem>>, %arg4: memref<32x256xbf16, #tpu.memory_space<vmem>>, %arg5: memref<8x256xbf16, #tpu.memory_space<vmem>>, %arg6: memref<8x256xbf16, #tpu.memory_space<vmem>>, %arg7: memref<16x256xbf16, #tpu.memory_space<vmem>>, %arg8: memref<8x256xbf16, #tpu.memory_space<vmem>>, %arg9: memref<1x256xf32, #tpu.memory_space<vmem>>, %arg10: memref<256x128xbf16, #tpu.memory_space<vmem>>, %arg11: memref<1x128xf32, #tpu.memory_space<vmem>>, %arg12: memref<1x8x8x128xf32, #tpu.memory_space<vmem>>) attributes {dimension_semantics = [#tpu.dimension_semantics<parallel>, #tpu.dimension_semantics<parallel>], iteration_bounds = array<i64: 2, 1>, scalar_prefetch = 0 : i64, scratch_operands = 0 : i64, tpu.core_type = #tpu.core_type<tc>, window_params = [{transform_indices = @transform_0, window_bounds = array<i64: 1, 8, 9, 32>}, {transform_indices = @transform_1, window_bounds = array<i64: 1, 1, 9, 32>}, {pipeline_mode = #tpu.pipeline_mode<synchronous>, transform_indices = @transform_2, window_bounds = array<i64: 32, 256>}, {pipeline_mode = #tpu.pipeline_mode<synchronous>, transform_indices = @transform_3, window_bounds = array<i64: 8, 256>}, {pipeline_mode = #tpu.pipeline_mode<synchronous>, transform_indices = @transform_4, window_bounds = array<i64: 8, 256>}, {pipeline_mode = #tpu.pipeline_mode<synchronous>, transform_indices = @transform_5, window_bounds = array<i64: 16, 256>}, {pipeline_mode = #tpu.pipeline_mode<synchronous>, transform_indices = @transform_6, window_bounds = array<i64: 8, 256>}, {pipeline_mode = #tpu.pipeline_mode<synchronous>, transform_indices = @transform_7, window_bounds = array<i64: 1, 256>}, {pipeline_mode = #tpu.pipeline_mode<synchronous>, transform_indices = @transform_8, window_bounds = array<i64: 256, 128>}, {pipeline_mode = #tpu.pipeline_mode<synchronous>, transform_indices = @transform_9, window_bounds = array<i64: 1, 128>}, {transform_indices = @transform_10, window_bounds = array<i64: 1, 8, 8, 128>}]} {
    %c0 = arith.constant 0 : index
    %c0_0 = arith.constant 0 : index
    %c0_1 = arith.constant 0 : index
    %c0_2 = arith.constant 0 : index
    %0 = vector.load %arg2[%c0, %c0_0, %c0_1, %c0_2] : memref<1x8x9x32xbf16, #tpu.memory_space<vmem>>, vector<1x8x9x32xbf16>
    %1 = vector.shape_cast %0 : vector<1x8x9x32xbf16> to vector<8x9x32xbf16>
    %c0_3 = arith.constant 0 : index
    %c0_4 = arith.constant 0 : index
    %c0_5 = arith.constant 0 : index
    %c0_6 = arith.constant 0 : index
    %2 = vector.load %arg3[%c0_3, %c0_4, %c0_5, %c0_6] : memref<1x1x9x32xbf16, #tpu.memory_space<vmem>>, vector<1x1x9x32xbf16>
    %3 = vector.shape_cast %2 : vector<1x1x9x32xbf16> to vector<1x9x32xbf16>
    %4 = vector.extract_strided_slice %1 {offsets = [1, 0, 0], sizes = [7, 9, 32], strides = [1, 1, 1]} : vector<8x9x32xbf16> to vector<7x9x32xbf16>
    %5 = tpu.concatenate %4, %3 in 0 : vector<7x9x32xbf16>, vector<1x9x32xbf16> -> vector<8x9x32xbf16>
    %6 = vector.extract_strided_slice %1 {offsets = [0, 0, 0], sizes = [8, 8, 32], strides = [1, 1, 1]} : vector<8x9x32xbf16> to vector<8x8x32xbf16>
    %7 = vector.shape_cast %6 : vector<8x8x32xbf16> to vector<64x32xbf16>
    %c0_7 = arith.constant 0 : index
    %c0_8 = arith.constant 0 : index
    %8 = vector.load %arg4[%c0_7, %c0_8] : memref<32x256xbf16, #tpu.memory_space<vmem>>, vector<32x256xbf16>
    %cst = arith.constant dense<0.000000e+00> : vector<64x256xf32>
    %9 = tpu.matmul %7, %8, %cst {dimension_numbers = #tpu.dot_dimension_numbers<[1], [0], [0], [1], [0, 0, 1, 1], [], []>} : vector<64x32xbf16>, vector<32x256xbf16>, vector<64x256xf32> -> vector<64x256xf32>
    %10 = vector.extract_strided_slice %1 {offsets = [0, 1, 0], sizes = [8, 8, 8], strides = [1, 1, 1]} : vector<8x9x32xbf16> to vector<8x8x8xbf16>
    %11 = vector.shape_cast %10 : vector<8x8x8xbf16> to vector<64x8xbf16>
    %c0_9 = arith.constant 0 : index
    %c0_10 = arith.constant 0 : index
    %12 = vector.load %arg5[%c0_9, %c0_10] : memref<8x256xbf16, #tpu.memory_space<vmem>>, vector<8x256xbf16>
    %cst_11 = arith.constant dense<0.000000e+00> : vector<64x256xf32>
    %13 = tpu.matmul %11, %12, %cst_11 {dimension_numbers = #tpu.dot_dimension_numbers<[1], [0], [0], [1], [0, 0, 1, 1], [], []>} : vector<64x8xbf16>, vector<8x256xbf16>, vector<64x256xf32> -> vector<64x256xf32>
    %14 = arith.addf %9, %13 : vector<64x256xf32>
    %15 = vector.extract_strided_slice %1 {offsets = [0, 1, 16], sizes = [8, 8, 8], strides = [1, 1, 1]} : vector<8x9x32xbf16> to vector<8x8x8xbf16>
    %16 = vector.shape_cast %15 : vector<8x8x8xbf16> to vector<64x8xbf16>
    %c0_12 = arith.constant 0 : index
    %c0_13 = arith.constant 0 : index
    %17 = vector.load %arg6[%c0_12, %c0_13] : memref<8x256xbf16, #tpu.memory_space<vmem>>, vector<8x256xbf16>
    %cst_14 = arith.constant dense<0.000000e+00> : vector<64x256xf32>
    %18 = tpu.matmul %16, %17, %cst_14 {dimension_numbers = #tpu.dot_dimension_numbers<[1], [0], [0], [1], [0, 0, 1, 1], [], []>} : vector<64x8xbf16>, vector<8x256xbf16>, vector<64x256xf32> -> vector<64x256xf32>
    %19 = arith.addf %14, %18 : vector<64x256xf32>
    %20 = vector.extract_strided_slice %5 {offsets = [0, 0, 0], sizes = [8, 8, 16], strides = [1, 1, 1]} : vector<8x9x32xbf16> to vector<8x8x16xbf16>
    %21 = vector.shape_cast %20 : vector<8x8x16xbf16> to vector<64x16xbf16>
    %c0_15 = arith.constant 0 : index
    %c0_16 = arith.constant 0 : index
    %22 = vector.load %arg7[%c0_15, %c0_16] : memref<16x256xbf16, #tpu.memory_space<vmem>>, vector<16x256xbf16>
    %cst_17 = arith.constant dense<0.000000e+00> : vector<64x256xf32>
    %23 = tpu.matmul %21, %22, %cst_17 {dimension_numbers = #tpu.dot_dimension_numbers<[1], [0], [0], [1], [0, 0, 1, 1], [], []>} : vector<64x16xbf16>, vector<16x256xbf16>, vector<64x256xf32> -> vector<64x256xf32>
    %24 = arith.addf %19, %23 : vector<64x256xf32>
    %25 = vector.extract_strided_slice %5 {offsets = [0, 1, 0], sizes = [8, 8, 8], strides = [1, 1, 1]} : vector<8x9x32xbf16> to vector<8x8x8xbf16>
    %26 = vector.shape_cast %25 : vector<8x8x8xbf16> to vector<64x8xbf16>
    %c0_18 = arith.constant 0 : index
    %c0_19 = arith.constant 0 : index
    %27 = vector.load %arg8[%c0_18, %c0_19] : memref<8x256xbf16, #tpu.memory_space<vmem>>, vector<8x256xbf16>
    %cst_20 = arith.constant dense<0.000000e+00> : vector<64x256xf32>
    %28 = tpu.matmul %26, %27, %cst_20 {dimension_numbers = #tpu.dot_dimension_numbers<[1], [0], [0], [1], [0, 0, 1, 1], [], []>} : vector<64x8xbf16>, vector<8x256xbf16>, vector<64x256xf32> -> vector<64x256xf32>
    %29 = arith.addf %24, %28 : vector<64x256xf32>
    %c0_21 = arith.constant 0 : index
    %c0_22 = arith.constant 0 : index
    %30 = vector.load %arg9[%c0_21, %c0_22] : memref<1x256xf32, #tpu.memory_space<vmem>>, vector<1x256xf32>
    %31 = vector.broadcast %30 : vector<1x256xf32> to vector<64x256xf32>
    %32 = arith.addf %29, %31 : vector<64x256xf32>
    %cst_23 = arith.constant 0.000000e+00 : f32
    %33 = vector.broadcast %cst_23 : f32 to vector<64x256xf32>
    %34 = arith.maximumf %32, %33 : vector<64x256xf32>
    %35 = arith.truncf %34 : vector<64x256xf32> to vector<64x256xbf16>
    %c0_24 = arith.constant 0 : index
    %c0_25 = arith.constant 0 : index
    %36 = vector.load %arg10[%c0_24, %c0_25] : memref<256x128xbf16, #tpu.memory_space<vmem>>, vector<256x128xbf16>
    %cst_26 = arith.constant dense<0.000000e+00> : vector<64x128xf32>
    %37 = tpu.matmul %35, %36, %cst_26 {dimension_numbers = #tpu.dot_dimension_numbers<[1], [0], [0], [1], [0, 0, 1, 1], [], []>} : vector<64x256xbf16>, vector<256x128xbf16>, vector<64x128xf32> -> vector<64x128xf32>
    %c0_27 = arith.constant 0 : index
    %c0_28 = arith.constant 0 : index
    %38 = vector.load %arg11[%c0_27, %c0_28] : memref<1x128xf32, #tpu.memory_space<vmem>>, vector<1x128xf32>
    %39 = vector.broadcast %38 : vector<1x128xf32> to vector<64x128xf32>
    %40 = arith.addf %37, %39 : vector<64x128xf32>
    %41 = vector.shape_cast %40 : vector<64x128xf32> to vector<1x8x8x128xf32>
    %c0_29 = arith.constant 0 : index
    %c0_30 = arith.constant 0 : index
    %c0_31 = arith.constant 0 : index
    %c0_32 = arith.constant 0 : index
    %42 = vector.load %arg12[%c0_29, %c0_30, %c0_31, %c0_32] : memref<1x8x8x128xf32, #tpu.memory_space<vmem>>, vector<1x8x8x128xf32>
    tpu.vector_store %arg12[%c0_29, %c0_30, %c0_31, %c0_32], %41 {strides = array<i32>} : memref<1x8x8x128xf32, #tpu.memory_space<vmem>>, vector<1x8x8x128xf32>,
    return
  }
  func.func @transform_0(%arg0: i32, %arg1: i32) -> (i32, i32, i32, i32) {
    %c0_i32 = arith.constant 0 : i32
    %c0_i32_0 = arith.constant 0 : i32
    %c0_i32_1 = arith.constant 0 : i32
    return %arg0, %arg1, %c0_i32, %c0_i32_0 : i32, i32, i32, i32
  }
  func.func @transform_1(%arg0: i32, %arg1: i32) -> (i32, i32, i32, i32) {
    %c1_i32 = arith.constant 1 : i32
    %0 = arith.addi %arg1, %c1_i32 : i32
    %c8_i32 = arith.constant 8 : i32
    %1 = arith.muli %0, %c8_i32 : i32
    %c0_i32 = arith.constant 0 : i32
    %c0_i32_0 = arith.constant 0 : i32
    %c0_i32_1 = arith.constant 0 : i32
    return %arg0, %1, %c0_i32, %c0_i32_0 : i32, i32, i32, i32
  }
  func.func @transform_2(%arg0: i32, %arg1: i32) -> (i32, i32) {
    %c0_i32 = arith.constant 0 : i32
    %c0_i32_0 = arith.constant 0 : i32
    %c0_i32_1 = arith.constant 0 : i32
    return %c0_i32, %c0_i32_0 : i32, i32
  }
  func.func @transform_3(%arg0: i32, %arg1: i32) -> (i32, i32) {
    %c0_i32 = arith.constant 0 : i32
    %c0_i32_0 = arith.constant 0 : i32
    %c0_i32_1 = arith.constant 0 : i32
    return %c0_i32, %c0_i32_0 : i32, i32
  }
  func.func @transform_4(%arg0: i32, %arg1: i32) -> (i32, i32) {
    %c0_i32 = arith.constant 0 : i32
    %c0_i32_0 = arith.constant 0 : i32
    %c0_i32_1 = arith.constant 0 : i32
    return %c0_i32, %c0_i32_0 : i32, i32
  }
  func.func @transform_5(%arg0: i32, %arg1: i32) -> (i32, i32) {
    %c0_i32 = arith.constant 0 : i32
    %c0_i32_0 = arith.constant 0 : i32
    %c0_i32_1 = arith.constant 0 : i32
    return %c0_i32, %c0_i32_0 : i32, i32
  }
  func.func @transform_6(%arg0: i32, %arg1: i32) -> (i32, i32) {
    %c0_i32 = arith.constant 0 : i32
    %c0_i32_0 = arith.constant 0 : i32
    %c0_i32_1 = arith.constant 0 : i32
    return %c0_i32, %c0_i32_0 : i32, i32
  }
  func.func @transform_7(%arg0: i32, %arg1: i32) -> (i32, i32) {
    %c0_i32 = arith.constant 0 : i32
    %c0_i32_0 = arith.constant 0 : i32
    %c0_i32_1 = arith.constant 0 : i32
    return %c0_i32, %c0_i32_0 : i32, i32
  }
  func.func @transform_8(%arg0: i32, %arg1: i32) -> (i32, i32) {
    %c0_i32 = arith.constant 0 : i32
    %c0_i32_0 = arith.constant 0 : i32
    %c0_i32_1 = arith.constant 0 : i32
    return %c0_i32, %c0_i32_0 : i32, i32
  }
  func.func @transform_9(%arg0: i32, %arg1: i32) -> (i32, i32) {
    %c0_i32 = arith.constant 0 : i32
    %c0_i32_0 = arith.constant 0 : i32
    %c0_i32_1 = arith.constant 0 : i32
    return %c0_i32, %c0_i32_0 : i32, i32
  }
  func.func @transform_10(%arg0: i32, %arg1: i32) -> (i32, i32, i32, i32) {
    %c0_i32 = arith.constant 0 : i32
    %c0_i32_0 = arith.constant 0 : i32
    %c0_i32_1 = arith.constant 0 : i32
    return %arg0, %arg1, %c0_i32, %c0_i32_0 : i32, i32, i32, i32
  }
}

</mosaic_0001>

<llo_original>
// kernel: superpoint_decoder_forward.1
$region0: #{superpoint_decoder_forward.1}
  #allocation0 [shape = 'u32[]', space=smem, size = 0x4, offset = 0x4, fixed_abs, tag = 'smem constant byte address 0x4 - core index']
  #allocation1 [shape = 'u32[72,128]{1,0:T(1,128)}', space=vmem, size = 0x9000, scoped, tag = 'internal scratch']
  %s0 = inlined_call_operand.vmem [shape: bf16[2,9,9,32], index: 0, kind: input, shape index: {}, may-alias: {0,1}]
  %s1 = inlined_call_operand.vmem [shape: bf16[2,9,9,32], index: 1, kind: input, shape index: {}, may-alias: {0,1}]
  %s2 = inlined_call_operand.vmem [shape: bf16[32,256], index: 2, kind: input, shape index: {}]
  %s3 = inlined_call_operand.vmem [shape: bf16[8,256], index: 3, kind: input, shape index: {}]
  %s4 = inlined_call_operand.vmem [shape: bf16[8,256], index: 4, kind: input, shape index: {}]
  %s5 = inlined_call_operand.vmem [shape: bf16[16,256], index: 5, kind: input, shape index: {}]
  %s6 = inlined_call_operand.vmem [shape: bf16[8,256], index: 6, kind: input, shape index: {}]
  %s7 = inlined_call_operand.vmem [shape: f32[1,256], index: 7, kind: input, shape index: {}]
  %s8 = inlined_call_operand.vmem [shape: bf16[256,128], index: 8, kind: input, shape index: {}]
  %s9 = inlined_call_operand.vmem [shape: f32[1,128], index: 9, kind: input, shape index: {}]
  %s10 = inlined_call_operand.vmem [shape: f32[2,8,8,128], index: 10, kind: output, shape index: {}]
  %s11 = sld [smem:[#allocation0]]
  $region73: #{superpoint_decoder_forward.1} parent=0
    _
  %s13 = ssub.s32 1, %s11
  %s14 = scalar_select 0, %s13, %s11
  loop: start=0, step=1, limit=4
  $region2: #{superpoint_decoder_forward.1} parent=0 // loop_pre_header
    _
  $region3: #{superpoint_decoder_forward.1} parent=0 // loop_header
    %s16 = sphi 0, %s20
    %p17 = scmp.ge.s32.totalorder %s16, 4
    %s23 = sphi 0, %s35
    %s24 = sphi 0, %s31
    %s25 = sphi 0, %s23
    %s26 = sphi 0, %s24
    %s27 = sphi 0, %s25
    %s28 = sphi 0, %s26
    %s40 = sphi 0, %s42
    %s43 = sphi 0, %s40
    %s44 = sphi 0, %s43
    %s60 = sphi 0, %s44
    %s72 = sphi 0, %s74
    %s75 = sphi 0, %s72
    %s76 = sphi 0, %s75
    %s92 = sphi 0, %s76
    %s96 = sphi 0, %s96
    %s98 = sphi 0, %s96
    %s99 = sphi 0, %s98
    %s113 = sphi 0, %s99
    %s117 = sphi 0, %s117
    %s119 = sphi 0, %s117
    %s120 = sphi 0, %s119
    %s134 = sphi 0, %s120
    %s138 = sphi 0, %s138
    %s140 = sphi 0, %s138
    %s141 = sphi 0, %s140
    %s155 = sphi 0, %s141
    %s159 = sphi 0, %s159
    %s161 = sphi 0, %s159
    %s162 = sphi 0, %s161
    %s176 = sphi 0, %s162
    %s180 = sphi 0, %s180
    %s182 = sphi 0, %s180
    %s183 = sphi 0, %s182
    %s197 = sphi 0, %s183
    %s201 = sphi 0, %s201
    %s203 = sphi 0, %s201
    %s204 = sphi 0, %s203
    %s218 = sphi 0, %s204
    %s222 = sphi 0, %s222
    %s224 = sphi 0, %s222
    %s225 = sphi 0, %s224
    %s239 = sphi 0, %s225
    %s243 = sphi 0, %s243
    %s245 = sphi 0, %s243
    %s246 = sphi 0, %s245
    %s260 = sphi 0, %s246
    %s268 = sphi 0, %s270
    %s271 = sphi 0, %s268
    %s272 = sphi 0, %s271
    %s288 = sphi 0, %s272
  $region4: #{superpoint_decoder_forward.1} parent=0 // loop_header_branch
    %19 = sbr.rel (%p17) target = $region8
  $region5: #{superpoint_decoder_forward.1} parent=0 // loop_body
    %s21 = ssub.s32 %s16, 1
    %s22 = ssub.s32 %s16, 2
    %s29 = sadd.s32 1, %s24
    %p30 = scmp.ge.s32.totalorder %s29, 1
    %s31 = scalar_select %p30, 0, %s29
    %s32 = sadd.s32 1, %s23
    %s33 = scalar_select %p30, %s32, %s23
    %p34 = scmp.ge.s32.totalorder %s33, 2
    %s35 = scalar_select %p34, 0, %s33
    %s36 = ssub.s32 %s23, %s35
    %s37 = ssub.s32 %s24, %s31
    %s38 = sor.u32 %s36, %s37
    %p39 = scmp.eq.s32.totalorder %s38, 0
    %s41 = sadd.s32 %s40, 1
    %s42 = scalar_select %p39, %s40, %s41
    %p45 = pneg %p39
    %p46 = scmp.eq.s32.totalorder %s16, 1
    %p47 = por %p45, %p46
    %p48 = scmp.ne.s32.totalorder %s40, %s43
    %p49 = scmp.eq.s32.totalorder %s16, 0
    %p50 = por %p48, %p49
    %p51 = scmp.ne.s32.totalorder %s40, %s43
    %p52 = scmp.eq.s32.totalorder %s21, 1
    %p53 = por %p51, %p52
    %p54 = scmp.ne.s32.totalorder %s43, %s44
    %p55 = scmp.eq.s32.totalorder %s21, 0
    %p56 = por %p54, %p55
    %p57 = scmp.ne.s32.totalorder %s43, %s44
    %p58 = scmp.eq.s32.totalorder %s22, 1
    %p59 = por %p57, %p58
    %p61 = scmp.ne.s32.totalorder %s44, %s60
    %p62 = scmp.eq.s32.totalorder %s22, 0
    %p63 = por %p61, %p62
    %s64 = sadd.s32 %s24, 1
    %s65 = smul.u32 %s64, 8
    %s66 = sadd.s32 %s31, 1
    %s67 = smul.u32 %s66, 8
    %s68 = ssub.s32 %s23, %s35
    %s69 = ssub.s32 %s65, %s67
    %s70 = sor.u32 %s68, %s69
    %p71 = scmp.eq.s32.totalorder %s70, 0
    %s73 = sadd.s32 %s72, 1
    %s74 = scalar_select %p71, %s72, %s73
    %p77 = pneg %p71
    %p78 = scmp.eq.s32.totalorder %s16, 1
    %p79 = por %p77, %p78
    %p80 = scmp.ne.s32.totalorder %s72, %s75
    %p81 = scmp.eq.s32.totalorder %s16, 0
    %p82 = por %p80, %p81
    %p83 = scmp.ne.s32.totalorder %s72, %s75
    %p84 = scmp.eq.s32.totalorder %s21, 1
    %p85 = por %p83, %p84
    %p86 = scmp.ne.s32.totalorder %s75, %s76
    %p87 = scmp.eq.s32.totalorder %s21, 0
    %p88 = por %p86, %p87
    %p89 = scmp.ne.s32.totalorder %s75, %s76
    %p90 = scmp.eq.s32.totalorder %s22, 1
    %p91 = por %p89, %p90
    %p93 = scmp.ne.s32.totalorder %s76, %s92
    %p94 = scmp.eq.s32.totalorder %s22, 0
    %p95 = por %p93, %p94
    %s97 = sadd.s32 %s96, 1
    %p100 = scmp.eq.s32.totalorder %s16, 1
    %p101 = scmp.ne.s32.totalorder %s96, %s98
    %p102 = scmp.eq.s32.totalorder %s16, 0
    %p103 = por %p101, %p102
    %p104 = scmp.ne.s32.totalorder %s96, %s98
    %p105 = scmp.eq.s32.totalorder %s21, 1
    %p106 = por %p104, %p105
    %p107 = scmp.ne.s32.totalorder %s98, %s99
    %p108 = scmp.eq.s32.totalorder %s21, 0
    %p109 = por %p107, %p108
    %p110 = scmp.ne.s32.totalorder %s98, %s99
    %p111 = scmp.eq.s32.totalorder %s22, 1
    %p112 = por %p110, %p111
    %p114 = scmp.ne.s32.totalorder %s99, %s113
    %p115 = scmp.eq.s32.totalorder %s22, 0
    %p116 = por %p114, %p115
    %s118 = sadd.s32 %s117, 1
    %p121 = scmp.eq.s32.totalorder %s16, 1
    %p122 = scmp.ne.s32.totalorder %s117, %s119
    %p123 = scmp.eq.s32.totalorder %s16, 0
    %p124 = por %p122, %p123
    %p125 = scmp.ne.s32.totalorder %s117, %s119
    %p126 = scmp.eq.s32.totalorder %s21, 1
    %p127 = por %p125, %p126
    %p128 = scmp.ne.s32.totalorder %s119, %s120
    %p129 = scmp.eq.s32.totalorder %s21, 0
    %p130 = por %p128, %p129
    %p131 = scmp.ne.s32.totalorder %s119, %s120
    %p132 = scmp.eq.s32.totalorder %s22, 1
    %p133 = por %p131, %p132
    %p135 = scmp.ne.s32.totalorder %s120, %s134
    %p136 = scmp.eq.s32.totalorder %s22, 0
    %p137 = por %p135, %p136
    %s139 = sadd.s32 %s138, 1
    %p142 = scmp.eq.s32.totalorder %s16, 1
    %p143 = scmp.ne.s32.totalorder %s138, %s140
    %p144 = scmp.eq.s32.totalorder %s16, 0
    %p145 = por %p143, %p144
    %p146 = scmp.ne.s32.totalorder %s138, %s140
    %p147 = scmp.eq.s32.totalorder %s21, 1
    %p148 = por %p146, %p147
    %p149 = scmp.ne.s32.totalorder %s140, %s141
    %p150 = scmp.eq.s32.totalorder %s21, 0
    %p151 = por %p149, %p150
    %p152 = scmp.ne.s32.totalorder %s140, %s141
    %p153 = scmp.eq.s32.totalorder %s22, 1
    %p154 = por %p152, %p153
    %p156 = scmp.ne.s32.totalorder %s141, %s155
    %p157 = scmp.eq.s32.totalorder %s22, 0
    %p158 = por %p156, %p157
    %s160 = sadd.s32 %s159, 1
    %p163 = scmp.eq.s32.totalorder %s16, 1
    %p164 = scmp.ne.s32.totalorder %s159, %s161
    %p165 = scmp.eq.s32.totalorder %s16, 0
    %p166 = por %p164, %p165
    %p167 = scmp.ne.s32.totalorder %s159, %s161
    %p168 = scmp.eq.s32.totalorder %s21, 1
    %p169 = por %p167, %p168
    %p170 = scmp.ne.s32.totalorder %s161, %s162
    %p171 = scmp.eq.s32.totalorder %s21, 0
    %p172 = por %p170, %p171
    %p173 = scmp.ne.s32.totalorder %s161, %s162
    %p174 = scmp.eq.s32.totalorder %s22, 1
    %p175 = por %p173, %p174
    %p177 = scmp.ne.s32.totalorder %s162, %s176
    %p178 = scmp.eq.s32.totalorder %s22, 0
    %p179 = por %p177, %p178
    %s181 = sadd.s32 %s180, 1
    %p184 = scmp.eq.s32.totalorder %s16, 1
    %p185 = scmp.ne.s32.totalorder %s180, %s182
    %p186 = scmp.eq.s32.totalorder %s16, 0
    %p187 = por %p185, %p186
    %p188 = scmp.ne.s32.totalorder %s180, %s182
    %p189 = scmp.eq.s32.totalorder %s21, 1
    %p190 = por %p188, %p189
    %p191 = scmp.ne.s32.totalorder %s182, %s183
    %p192 = scmp.eq.s32.totalorder %s21, 0
    %p193 = por %p191, %p192
    %p194 = scmp.ne.s32.totalorder %s182, %s183
    %p195 = scmp.eq.s32.totalorder %s22, 1
    %p196 = por %p194, %p195
    %p198 = scmp.ne.s32.totalorder %s183, %s197
    %p199 = scmp.eq.s32.totalorder %s22, 0
    %p200 = por %p198, %p199
    %s202 = sadd.s32 %s201, 1
    %p205 = scmp.eq.s32.totalorder %s16, 1
    %p206 = scmp.ne.s32.totalorder %s201, %s203
    %p207 = scmp.eq.s32.totalorder %s16, 0
    %p208 = por %p206, %p207
    %p209 = scmp.ne.s32.totalorder %s201, %s203
    %p210 = scmp.eq.s32.totalorder %s21, 1
    %p211 = por %p209, %p210
    %p212 = scmp.ne.s32.totalorder %s203, %s204
    %p213 = scmp.eq.s32.totalorder %s21, 0
    %p214 = por %p212, %p213
    %p215 = scmp.ne.s32.totalorder %s203, %s204
    %p216 = scmp.eq.s32.totalorder %s22, 1
    %p217 = por %p215, %p216
    %p219 = scmp.ne.s32.totalorder %s204, %s218
    %p220 = scmp.eq.s32.totalorder %s22, 0
    %p221 = por %p219, %p220
    %s223 = sadd.s32 %s222, 1
    %p226 = scmp.eq.s32.totalorder %s16, 1
    %p227 = scmp.ne.s32.totalorder %s222, %s224
    %p228 = scmp.eq.s32.totalorder %s16, 0
    %p229 = por %p227, %p228
    %p230 = scmp.ne.s32.totalorder %s222, %s224
    %p231 = scmp.eq.s32.totalorder %s21, 1
    %p232 = por %p230, %p231
    %p233 = scmp.ne.s32.totalorder %s224, %s225
    %p234 = scmp.eq.s32.totalorder %s21, 0
    %p235 = por %p233, %p234
    %p236 = scmp.ne.s32.totalorder %s224, %s225
    %p237 = scmp.eq.s32.totalorder %s22, 1
    %p238 = por %p236, %p237
    %p240 = scmp.ne.s32.totalorder %s225, %s239
    %p241 = scmp.eq.s32.totalorder %s22, 0
    %p242 = por %p240, %p241
    %s244 = sadd.s32 %s243, 1
    %p247 = scmp.eq.s32.totalorder %s16, 1
    %p248 = scmp.ne.s32.totalorder %s243, %s245
    %p249 = scmp.eq.s32.totalorder %s16, 0
    %p250 = por %p248, %p249
    %p251 = scmp.ne.s32.totalorder %s243, %s245
    %p252 = scmp.eq.s32.totalorder %s21, 1
    %p253 = por %p251, %p252
    %p254 = scmp.ne.s32.totalorder %s245, %s246
    %p255 = scmp.eq.s32.totalorder %s21, 0
    %p256 = por %p254, %p255
    %p257 = scmp.ne.s32.totalorder %s245, %s246
    %p258 = scmp.eq.s32.totalorder %s22, 1
    %p259 = por %p257, %p258
    %p261 = scmp.ne.s32.totalorder %s246, %s260
    %p262 = scmp.eq.s32.totalorder %s22, 0
    %p263 = por %p261, %p262
    %s264 = ssub.s32 %s23, %s35
    %s265 = ssub.s32 %s24, %s31
    %s266 = sor.u32 %s264, %s265
    %p267 = scmp.eq.s32.totalorder %s266, 0
    %s269 = sadd.s32 %s268, 1
    %s270 = scalar_select %p267, %s268, %s269
    %p273 = pneg %p267
    %p274 = scmp.eq.s32.totalorder %s16, 1
    %p275 = por %p273, %p274
    %p276 = scmp.ne.s32.totalorder %s268, %s271
    %p277 = scmp.eq.s32.totalorder %s16, 0
    %p278 = por %p276, %p277
    %p279 = scmp.ne.s32.totalorder %s268, %s271
    %p280 = scmp.eq.s32.totalorder %s21, 1
    %p281 = por %p279, %p280
    %p282 = scmp.ne.s32.totalorder %s271, %s272
    %p283 = scmp.eq.s32.totalorder %s21, 0
    %p284 = por %p282, %p283
    %p285 = scmp.ne.s32.totalorder %s271, %s272
    %p286 = scmp.eq.s32.totalorder %s22, 1
    %p287 = por %p285, %p286
    %p289 = scmp.ne.s32.totalorder %s272, %s288
    %p290 = scmp.eq.s32.totalorder %s22, 0
    %p291 = por %p289, %p290
    %p292 = scmp.le.s32.totalorder 1, %s16
    %p293 = scmp.lt.s32.totalorder %s16, 3
    %p294 = pnand %p292, %p293
    %p295 = pneg %p294
    // Predicated region
    $region9: #{superpoint_decoder_forward.1} parent=5 // pred_check
      _
    $region10: #{superpoint_decoder_forward.1} parent=5 // pred_check_branch
      %297 = sbr.rel (%p294) target = $region12
    $region11: #{superpoint_decoder_forward.1} parent=5 // pred_region
      %s298 = ssub.s32 %s16, 1
      // Predicated region
      $region13: #{superpoint_decoder_forward.1} parent=11 // pred_check
        %p299 = pneg %p109
      $region14: #{superpoint_decoder_forward.1} parent=11 // pred_check_branch
        %301 = sbr.rel (%p299) target = $region16
      $region15: #{superpoint_decoder_forward.1} parent=11 // pred_region
        _
      $region16: #{superpoint_decoder_forward.1} parent=11 // pred_fallthru
        _
      // Predicated region
      $region17: #{superpoint_decoder_forward.1} parent=11 // pred_check
        %p302 = pneg %p130
      $region18: #{superpoint_decoder_forward.1} parent=11 // pred_check_branch
        %304 = sbr.rel (%p302) target = $region20
      $region19: #{superpoint_decoder_forward.1} parent=11 // pred_region
        _
      $region20: #{superpoint_decoder_forward.1} parent=11 // pred_fallthru
        _
      // Predicated region
      $region21: #{superpoint_decoder_forward.1} parent=11 // pred_check
        %p305 = pneg %p151
      $region22: #{superpoint_decoder_forward.1} parent=11 // pred_check_branch
        %307 = sbr.rel (%p305) target = $region24
      $region23: #{superpoint_decoder_forward.1} parent=11 // pred_region
        _
      $region24: #{superpoint_decoder_forward.1} parent=11 // pred_fallthru
        _
      // Predicated region
      $region25: #{superpoint_decoder_forward.1} parent=11 // pred_check
        %p308 = pneg %p172
      $region26: #{superpoint_decoder_forward.1} parent=11 // pred_check_branch
        %310 = sbr.rel (%p308) target = $region28
      $region27: #{superpoint_decoder_forward.1} parent=11 // pred_region
        _
      $region28: #{superpoint_decoder_forward.1} parent=11 // pred_fallthru
        _
      // Predicated region
      $region29: #{superpoint_decoder_forward.1} parent=11 // pred_check
        %p311 = pneg %p193
      $region30: #{superpoint_decoder_forward.1} parent=11 // pred_check_branch
        %313 = sbr.rel (%p311) target = $region32
      $region31: #{superpoint_decoder_forward.1} parent=11 // pred_region
        _
      $region32: #{superpoint_decoder_forward.1} parent=11 // pred_fallthru
        _
      // Predicated region
      $region33: #{superpoint_decoder_forward.1} parent=11 // pred_check
        %p314 = pneg %p214
      $region34: #{superpoint_decoder_forward.1} parent=11 // pred_check_branch
        %316 = sbr.rel (%p314) target = $region36
      $region35: #{superpoint_decoder_forward.1} parent=11 // pred_region
        _
      $region36: #{superpoint_decoder_forward.1} parent=11 // pred_fallthru
        _
      // Predicated region
      $region37: #{superpoint_decoder_forward.1} parent=11 // pred_check
        %p317 = pneg %p235
      $region38: #{superpoint_decoder_forward.1} parent=11 // pred_check_branch
        %319 = sbr.rel (%p317) target = $region40
      $region39: #{superpoint_decoder_forward.1} parent=11 // pred_region
        _
      $region40: #{superpoint_decoder_forward.1} parent=11 // pred_fallthru
        _
      // Predicated region
      $region41: #{superpoint_decoder_forward.1} parent=11 // pred_check
        %p320 = pneg %p256
      $region42: #{superpoint_decoder_forward.1} parent=11 // pred_check_branch
        %322 = sbr.rel (%p320) target = $region44
      $region43: #{superpoint_decoder_forward.1} parent=11 // pred_region
        _
      $region44: #{superpoint_decoder_forward.1} parent=11 // pred_fallthru
        _
    $region12: #{superpoint_decoder_forward.1} parent=5 // pred_fallthru
      _
    %p323 = scmp.lt.s32.totalorder %s16, 2
    // Predicated region
    $region45: #{superpoint_decoder_forward.1} parent=5 // pred_check
      %p324 = pneg %p323
    $region46: #{superpoint_decoder_forward.1} parent=5 // pred_check_branch
      %326 = sbr.rel (%p324) target = $region48
    $region47: #{superpoint_decoder_forward.1} parent=5 // pred_region
      // Predicated region
      $region49: #{superpoint_decoder_forward.1} parent=47 // pred_check
        %p327 = pneg %p50
      $region50: #{superpoint_decoder_forward.1} parent=47 // pred_check_branch
        %329 = sbr.rel (%p327) target = $region52
      $region51: #{superpoint_decoder_forward.1} parent=47 // pred_region
        %s330 = smul.u32 8, %s24
        %s331 = ssub.s32 9, %s330
        %p332 = scmp.lt.s32.totalorder %s331, 8
        %s333 = scalar_select %p332, %s331, 8
        %s334 = smul.u32 4, %s333
        %s335 = smul.u32 %s334, 2
        %p336 = scmp.lt.s32.totalorder %s23, 1
        %s337 = scalar_select %p336, %s23, 1
        %p338 = scmp.lt.s32.totalorder %s330, 8
        %s339 = scalar_select %p338, %s330, 8
        %s340 = smul.addr %s339, 2
        %s341 = smul.addr %s337, 18
        %s342 = sadd.s32 %s340, %s341
        %s343 = smul.addr %s342, 4
        %s344 = scalar_lea.vmem %s0, %s343
        %s345 = smul.u32 8, %s24
        %s346 = ssub.s32 9, %s345
        %p347 = scmp.lt.s32.totalorder %s346, 8
        %s348 = scalar_select %p347, %s346, 8
        %s349 = smul.u32 4, %s348
        %s350 = smul.u32 %s349, 2
      $region52: #{superpoint_decoder_forward.1} parent=47 // pred_fallthru
        _
      // Predicated region
      $region53: #{superpoint_decoder_forward.1} parent=47 // pred_check
        %p351 = pneg %p82
      $region54: #{superpoint_decoder_forward.1} parent=47 // pred_check_branch
        %353 = sbr.rel (%p351) target = $region56
      $region55: #{superpoint_decoder_forward.1} parent=47 // pred_region
        %s354 = sadd.s32 %s24, 1
        %s355 = smul.u32 %s354, 8
        %p356 = scmp.lt.s32.totalorder %s23, 1
        %s357 = scalar_select %p356, %s23, 1
        %p358 = scmp.lt.s32.totalorder %s355, 8
        %s359 = scalar_select %p358, %s355, 8
        %s360 = smul.addr %s359, 2
        %s361 = smul.addr %s357, 18
        %s362 = sadd.s32 %s360, %s361
        %s363 = smul.addr %s362, 4
        %s364 = scalar_lea.vmem %s1, %s363
        %s365 = sadd.s32 %s24, 1
        %s366 = smul.u32 %s365, 8
      $region56: #{superpoint_decoder_forward.1} parent=47 // pred_fallthru
        _
    $region48: #{superpoint_decoder_forward.1} parent=5 // pred_fallthru
      _
    %p367 = scmp.le.s32.totalorder 1, %s16
    %p368 = scmp.lt.s32.totalorder %s16, 3
    %p369 = pnand %p367, %p368
    %p370 = pneg %p369
    // Predicated region
    $region57: #{superpoint_decoder_forward.1} parent=5 // pred_check
      _
    $region58: #{superpoint_decoder_forward.1} parent=5 // pred_check_branch
      %372 = sbr.rel (%p369) target = $region60
    $region59: #{superpoint_decoder_forward.1} parent=5 // pred_region
      %s373 = ssub.s32 %s16, 1
      %s374 = smul.u32 8, %s26
      %s375 = ssub.s32 9, %s374
      %p376 = scmp.lt.s32.totalorder %s375, 8
      %s377 = scalar_select %p376, %s375, 8
      %s378 = smul.u32 4, %s377
      %s379 = smul.u32 %s378, 2
      %p380 = scmp.lt.s32.totalorder %s25, 1
      %s381 = scalar_select %p380, %s25, 1
      %p382 = scmp.lt.s32.totalorder %s374, 8
      %s383 = scalar_select %p382, %s374, 8
      %s384 = smul.addr %s383, 2
      %s385 = smul.addr %s381, 18
      %s386 = sadd.s32 %s384, %s385
      %s387 = smul.addr %s386, 4
      %s388 = scalar_lea.vmem %s0, %s387
      %p389 = pneg %p56
      %p390 = pneg %p53
      %s391 = sadd.s32 %s26, 1
      %s392 = smul.u32 %s391, 8
      %p393 = scmp.lt.s32.totalorder %s25, 1
      %s394 = scalar_select %p393, %s25, 1
      %p395 = scmp.lt.s32.totalorder %s392, 8
      %s396 = scalar_select %p395, %s392, 8
      %s397 = smul.addr %s396, 2
      %s398 = smul.addr %s394, 18
      %s399 = sadd.s32 %s397, %s398
      %s400 = smul.addr %s399, 4
      %s401 = scalar_lea.vmem %s1, %s400
      %p402 = pneg %p88
      %p403 = pneg %p85
      %p404 = pneg %p109
      %p405 = pneg %p106
      %p406 = pneg %p130
      %p407 = pneg %p127
      %p408 = pneg %p151
      %p409 = pneg %p148
      %p410 = pneg %p172
      %p411 = pneg %p169
      %p412 = pneg %p193
      %p413 = pneg %p190
      %p414 = pneg %p214
      %p415 = pneg %p211
      %p416 = pneg %p235
      %p417 = pneg %p232
      %p418 = pneg %p256
      %p419 = pneg %p253
      %p420 = pneg %p284
      %p421 = pneg %p281
      %s422 = smul.u32 8, %s26
      %p423 = scmp.lt.s32.totalorder %s25, 1
      %s424 = scalar_select %p423, %s25, 1
      %p425 = scmp.lt.s32.totalorder %s422, 7
      %s426 = scalar_select %p425, %s422, 7
      %s427 = smul.addr %s424, 8
      %s428 = sadd.s32 %s426, %s427
      %s429 = smul.addr %s428, 8
      %s430 = scalar_lea.vmem %s10, %s429
      %s431 = smul.u32 8, %s26
      %s432 = ssub.s32 9, %s431
      %p433 = scmp.lt.s32.totalorder %s432, 8
      %s434 = scalar_select %p433, %s432, 8
      %s435 = smul.u32 4, %s434
      %s436 = smul.u32 %s435, 2
      %p437 = scmp.lt.s32.totalorder %s25, 1
      %s438 = scalar_select %p437, %s25, 1
      %p439 = scmp.lt.s32.totalorder %s431, 8
      %s440 = scalar_select %p439, %s431, 8
      %s441 = smul.addr %s440, 2
      %s442 = smul.addr %s438, 18
      %s443 = sadd.s32 %s441, %s442
      %s444 = smul.addr %s443, 4
      %s445 = scalar_lea.vmem %s0, %s444
      %s446 = smul.u32 8, %s26
      %s447 = ssub.s32 9, %s446
      %p448 = scmp.lt.s32.totalorder %s447, 8
      %s449 = scalar_select %p448, %s447, 8
      %s450 = smul.u32 4, %s449
      %s451 = smul.u32 %s450, 2
      %s452 = sadd.s32 %s26, 1
      %s453 = smul.u32 %s452, 8
      %p454 = scmp.lt.s32.totalorder %s25, 1
      %s455 = scalar_select %p454, %s25, 1
      %p456 = scmp.lt.s32.totalorder %s453, 8
      %s457 = scalar_select %p456, %s453, 8
      %s458 = smul.addr %s457, 2
      %s459 = smul.addr %s455, 18
      %s460 = sadd.s32 %s458, %s459
      %s461 = smul.addr %s460, 4
      %s462 = scalar_lea.vmem %s1, %s461
      %s463 = sadd.s32 %s26, 1
      %s464 = smul.u32 %s463, 8
      %s465 = smul.u32 8, %s26
      %p466 = scmp.lt.s32.totalorder %s25, 1
      %s467 = scalar_select %p466, %s25, 1
      %p468 = scmp.lt.s32.totalorder %s465, 7
      %s469 = scalar_select %p468, %s465, 7
      %s470 = smul.addr %s467, 8
      %s471 = sadd.s32 %s469, %s470
      %s472 = smul.addr %s471, 8
      %s473 = scalar_lea.vmem %s10, %s472
      %s474 = smul.u32 8, %s26
      %v476 = vld [vmem:[%s445] sm:$0xf]
      %v477 = vld [vmem:[%s445 + $0x4] sm:$0x1]
      %v478 = vld [vmem:[%s445 + $0x8] sm:$0xf]
      %v479 = vld [vmem:[%s445 + $0xc] sm:$0x1]
      %v480 = vld [vmem:[%s445 + $0x10] sm:$0xf]
      %v481 = vld [vmem:[%s445 + $0x14] sm:$0x1]
      %v482 = vld [vmem:[%s445 + $0x18] sm:$0xf]
      %v483 = vld [vmem:[%s445 + $0x1c] sm:$0x1]
      %v484 = vld [vmem:[%s445 + $0x20] sm:$0xf]
      %v485 = vld [vmem:[%s445 + $0x24] sm:$0x1]
      %v486 = vld [vmem:[%s445 + $0x28] sm:$0xf]
      %v487 = vld [vmem:[%s445 + $0x2c] sm:$0x1]
      %v488 = vld [vmem:[%s445 + $0x30] sm:$0xf]
      %v489 = vld [vmem:[%s445 + $0x34] sm:$0x1]
      %v490 = vld [vmem:[%s445 + $0x38] sm:$0xf]
      %v491 = vld [vmem:[%s445 + $0x3c] sm:$0x1]
      %v492 = vld [vmem:[%s462] sm:$0xf]
      %v493 = vld [vmem:[%s462 + $0x4] sm:$0x1]
      %v494 = vld [vmem:[%s2] sm:$0xff]
      %v495 = vld [vmem:[%s2 + $0x8] sm:$0xff]
      %v496 = vld [vmem:[%s2 + $0x10] sm:$0xff]
      %v497 = vld [vmem:[%s2 + $0x18] sm:$0xff]
      %vm498 = vsmask.f32 3328
      %vm499 = vsmask.f32 7440
      %vm500 = vmor %vm498, %vm499
      %v502 = vshrl.u32 %v476, 16
      %v504 = vrot.slane %v502, 4
      %v505 = vshll.u32 %v476, 16
      %v507 = vrot.slane %v505, 5
      %v508 = vor.u32 %v504, %v507
      %v509 = vrot.slane %v508, 4
      %v511 = vshll.u32 %v477, 16
      %v513 = vrot.slane %v511, 5
      %v514 = vsel %vm500, %v509, %v513
      %v516 = vshrl.u32 %v478, 16
      %v518 = vrot.slane %v516, 4
      %v519 = vshll.u32 %v478, 16
      %v521 = vrot.slane %v519, 5
      %v522 = vor.u32 %v518, %v521
      %v523 = vrot.slane %v522, 4
      %v525 = vshll.u32 %v479, 16
      %v527 = vrot.slane %v525, 5
      %v528 = vsel %vm500, %v523, %v527
      %v530 = vshrl.u32 %v480, 16
      %v532 = vrot.slane %v530, 4
      %v533 = vshll.u32 %v480, 16
      %v535 = vrot.slane %v533, 5
      %v536 = vor.u32 %v532, %v535
      %v537 = vrot.slane %v536, 4
      %v539 = vshll.u32 %v481, 16
      %v541 = vrot.slane %v539, 5
      %v542 = vsel %vm500, %v537, %v541
      %v544 = vshrl.u32 %v482, 16
      %v546 = vrot.slane %v544, 4
      %v547 = vshll.u32 %v482, 16
      %v549 = vrot.slane %v547, 5
      %v550 = vor.u32 %v546, %v549
      %v551 = vrot.slane %v550, 4
      %v553 = vshll.u32 %v483, 16
      %v555 = vrot.slane %v553, 5
      %v556 = vsel %vm500, %v551, %v555
      %v558 = vshrl.u32 %v484, 16
      %v560 = vrot.slane %v558, 4
      %v561 = vshll.u32 %v484, 16
      %v563 = vrot.slane %v561, 5
      %v564 = vor.u32 %v560, %v563
      %v565 = vrot.slane %v564, 4
      %v567 = vshll.u32 %v485, 16
      %v569 = vrot.slane %v567, 5
      %v570 = vsel %vm500, %v565, %v569
      %v572 = vshrl.u32 %v486, 16
      %v574 = vrot.slane %v572, 4
      %v575 = vshll.u32 %v486, 16
      %v577 = vrot.slane %v575, 5
      %v578 = vor.u32 %v574, %v577
      %v579 = vrot.slane %v578, 4
      %v581 = vshll.u32 %v487, 16
      %v583 = vrot.slane %v581, 5
      %v584 = vsel %vm500, %v579, %v583
      %v586 = vshrl.u32 %v488, 16
      %v588 = vrot.slane %v586, 4
      %v589 = vshll.u32 %v488, 16
      %v591 = vrot.slane %v589, 5
      %v592 = vor.u32 %v588, %v591
      %v593 = vrot.slane %v592, 4
      %v595 = vshll.u32 %v489, 16
      %v597 = vrot.slane %v595, 5
      %v598 = vsel %vm500, %v593, %v597
      %v600 = vshrl.u32 %v490, 16
      %v602 = vrot.slane %v600, 4
      %v603 = vshll.u32 %v490, 16
      %v605 = vrot.slane %v603, 5
      %v606 = vor.u32 %v602, %v605
      %v607 = vrot.slane %v606, 4
      %v609 = vshll.u32 %v491, 16
      %v611 = vrot.slane %v609, 5
      %v612 = vsel %vm500, %v607, %v611
      %v613 = vld [vmem:[%s3] sm:$0xff]
      %v614 = vunpack.c.l.b16 %v514
      %v615 = vunpack.c.l.b16 %v528
      %v616 = vunpack.c.l.b16 %v542
      %v617 = vunpack.c.l.b16 %v556
      %v618 = vunpack.c.l.b16 %v570
      %v619 = vunpack.c.l.b16 %v584
      %v620 = vunpack.c.l.b16 %v598
      %v621 = vunpack.c.l.b16 %v612
      %v622 = vpack.c.b16 %v615, %v614
      %v623 = vpack.c.b16 %v617, %v616
      %v624 = vpack.c.b16 %v619, %v618
      %v625 = vpack.c.b16 %v621, %v620
      %v627 = vunpack.c.l.b16 %v613
      %v628 = vunpack.c.h.b16 %v613
      %v629 = vpack.c.b16 %v627, %v627
      %v630 = vpack.c.b16 %v628, %v628
      %vm631 = vcmask 64512
      %v633 = vsel %vm631, %v622, 0
      %v636 = vsel %vm631, %v623, 0
      %v639 = vsel %vm631, %v624, 0
      %v642 = vsel %vm631, %v625, 0
      %vm644 = vcmask 1043456
      %v646 = vsel %vm644, %v629, 0
      %v649 = vsel %vm644, %v630, 0
      %651 = vmatpush.bf16.msra.mxu0 0
      %652 = vmatpush.bf16.msra.mxu0 0
      %653 = vmatpush.bf16.msra.mxu0 0
      %654 = vmatpush.bf16.msra.mxu0 0
      %655 = vmatpush.bf16.msra.mxu0 0
      %656 = vmatpush.bf16.msra.mxu0 0
      %657 = vmatpush.bf16.msra.mxu0 0
      %658 = vmatpush.bf16.msra.mxu0 %v646
      %659 = vmatmul.bf16.gmra.mxu0 %v633
      %v660 = vpop.f32.mrf.mxu0
      %v661 = vadd.f32 0.0, %v660
      %v662 = vpop.f32.mrf.mxu0
      %v663 = vadd.f32 0.0, %v662
      %664 = vmatmul.bf16.gmra.mxu0 %v636
      %v665 = vpop.f32.mrf.mxu0
      %v666 = vadd.f32 0.0, %v665
      %v667 = vpop.f32.mrf.mxu0
      %v668 = vadd.f32 0.0, %v667
      %669 = vmatmul.bf16.gmra.mxu0 %v639
      %v670 = vpop.f32.mrf.mxu0
      %v671 = vadd.f32 0.0, %v670
      %v672 = vpop.f32.mrf.mxu0
      %v673 = vadd.f32 0.0, %v672
      %674 = vmatmul.bf16.gmra.mxu0 %v642
      %v675 = vpop.f32.mrf.mxu0
      %v676 = vadd.f32 0.0, %v675
      %v677 = vpop.f32.mrf.mxu0
      %v678 = vadd.f32 0.0, %v677
      %679 = vdwg.mxu0
      %680 = vmatpush.bf16.msra.mxu0 0
      %681 = vmatpush.bf16.msra.mxu0 0
      %682 = vmatpush.bf16.msra.mxu0 0
      %683 = vmatpush.bf16.msra.mxu0 0
      %684 = vmatpush.bf16.msra.mxu0 0
      %685 = vmatpush.bf16.msra.mxu0 0
      %686 = vmatpush.bf16.msra.mxu0 0
      %687 = vmatpush.bf16.msra.mxu0 %v649
      %688 = vmatmul.bf16.gmra.mxu0 %v633
      %v689 = vpop.f32.mrf.mxu0
      %v690 = vadd.f32 0.0, %v689
      %v691 = vpop.f32.mrf.mxu0
      %v692 = vadd.f32 0.0, %v691
      %693 = vmatmul.bf16.gmra.mxu0 %v636
      %v694 = vpop.f32.mrf.mxu0
      %v695 = vadd.f32 0.0, %v694
      %v696 = vpop.f32.mrf.mxu0
      %v697 = vadd.f32 0.0, %v696
      %698 = vmatmul.bf16.gmra.mxu0 %v639
      %v699 = vpop.f32.mrf.mxu0
      %v700 = vadd.f32 0.0, %v699
      %v701 = vpop.f32.mrf.mxu0
      %v702 = vadd.f32 0.0, %v701
      %703 = vmatmul.bf16.gmra.mxu0 %v642
      %v704 = vpop.f32.mrf.mxu0
      %v705 = vadd.f32 0.0, %v704
      %v706 = vpop.f32.mrf.mxu0
      %v707 = vadd.f32 0.0, %v706
      %708 = vdwg.mxu0
      %v717 = vunpack.c.l.b16 %v476
      %v718 = vunpack.c.l.b16 %v478
      %v719 = vunpack.c.l.b16 %v480
      %v720 = vunpack.c.l.b16 %v482
      %v721 = vunpack.c.l.b16 %v484
      %v722 = vunpack.c.l.b16 %v486
      %v723 = vunpack.c.l.b16 %v488
      %v724 = vunpack.c.l.b16 %v490
      %v725 = vpack.c.b16 %v718, %v717
      %v726 = vpack.c.b16 %v720, %v719
      %v727 = vpack.c.b16 %v722, %v721
      %v728 = vpack.c.b16 %v724, %v723
      %v733 = vunpack.c.l.b16 %v494
      %v734 = vunpack.c.h.b16 %v494
      %v735 = vunpack.c.l.b16 %v495
      %v736 = vunpack.c.h.b16 %v495
      %v737 = vunpack.c.l.b16 %v496
      %v738 = vunpack.c.h.b16 %v496
      %v739 = vunpack.c.l.b16 %v497
      %v740 = vunpack.c.h.b16 %v497
      %v741 = vpack.c.b16 %v735, %v733
      %v742 = vpack.c.b16 %v736, %v734
      %v743 = vpack.c.b16 %v739, %v737
      %v744 = vpack.c.b16 %v740, %v738
      %vm749 = vcmask 261120
      %v751 = vsel %vm749, %v725, 0
      %v754 = vsel %vm749, %v726, 0
      %v757 = vsel %vm749, %v727, 0
      %v760 = vsel %vm749, %v728, 0
      %762 = vmatpush.bf16.msra.mxu0 0
      %763 = vmatpush.bf16.msra.mxu0 0
      %764 = vmatpush.bf16.msra.mxu0 0
      %765 = vmatpush.bf16.msra.mxu0 0
      %766 = vmatpush.bf16.msra.mxu0 0
      %767 = vmatpush.bf16.msra.mxu0 0
      %768 = vmatpush.bf16.msra.mxu0 %v743
      %769 = vmatpush.bf16.msra.mxu0 %v741
      %770 = vmatmul.bf16.gmra.mxu0 %v751
      %v771 = vpop.f32.mrf.mxu0
      %v772 = vadd.f32 %v661, %v771
      %v773 = vpop.f32.mrf.mxu0
      %v774 = vadd.f32 %v663, %v773
      %775 = vmatmul.bf16.gmra.mxu0 %v754
      %v776 = vpop.f32.mrf.mxu0
      %v777 = vadd.f32 %v666, %v776
      %v778 = vpop.f32.mrf.mxu0
      %v779 = vadd.f32 %v668, %v778
      %780 = vmatmul.bf16.gmra.mxu0 %v757
      %v781 = vpop.f32.mrf.mxu0
      %v782 = vadd.f32 %v671, %v781
      %v783 = vpop.f32.mrf.mxu0
      %v784 = vadd.f32 %v673, %v783
      %785 = vmatmul.bf16.gmra.mxu0 %v760
      %v786 = vpop.f32.mrf.mxu0
      %v787 = vadd.f32 %v676, %v786
      %v788 = vpop.f32.mrf.mxu0
      %v789 = vadd.f32 %v678, %v788
      %790 = vdwg.mxu0
      %791 = vmatpush.bf16.msra.mxu0 0
      %792 = vmatpush.bf16.msra.mxu0 0
      %793 = vmatpush.bf16.msra.mxu0 0
      %794 = vmatpush.bf16.msra.mxu0 0
      %795 = vmatpush.bf16.msra.mxu0 0
      %796 = vmatpush.bf16.msra.mxu0 0
      %797 = vmatpush.bf16.msra.mxu0 %v744
      %798 = vmatpush.bf16.msra.mxu0 %v742
      %799 = vmatmul.bf16.gmra.mxu0 %v751
      %v800 = vpop.f32.mrf.mxu0
      %v801 = vadd.f32 %v690, %v800
      %v802 = vpop.f32.mrf.mxu0
      %v803 = vadd.f32 %v692, %v802
      %804 = vmatmul.bf16.gmra.mxu0 %v754
      %v805 = vpop.f32.mrf.mxu0
      %v806 = vadd.f32 %v695, %v805
      %v807 = vpop.f32.mrf.mxu0
      %v808 = vadd.f32 %v697, %v807
      %809 = vmatmul.bf16.gmra.mxu0 %v757
      %v810 = vpop.f32.mrf.mxu0
      %v811 = vadd.f32 %v700, %v810
      %v812 = vpop.f32.mrf.mxu0
      %v813 = vadd.f32 %v702, %v812
      %814 = vmatmul.bf16.gmra.mxu0 %v760
      %v815 = vpop.f32.mrf.mxu0
      %v816 = vadd.f32 %v705, %v815
      %v817 = vpop.f32.mrf.mxu0
      %v818 = vadd.f32 %v707, %v817
      %819 = vdwg.mxu0
      %v820 = vld [vmem:[%s4] sm:$0xff]
      %821 = vrot.lane.b32.xlu0 %v622, 112
      %v822 = vpop.permute.xlu0 %821
      %823 = vrot.lane.b32.xlu0 %v623, 112
      %v824 = vpop.permute.xlu0 %823
      %825 = vrot.lane.b32.xlu0 %v624, 112
      %v826 = vpop.permute.xlu0 %825
      %827 = vrot.lane.b32.xlu0 %v625, 112
      %v828 = vpop.permute.xlu0 %827
      %v830 = vunpack.c.l.b16 %v820
      %v831 = vunpack.c.h.b16 %v820
      %v832 = vpack.c.b16 %v830, %v830
      %v833 = vpack.c.b16 %v831, %v831
      %v835 = vsel %vm631, %v822, 0
      %v838 = vsel %vm631, %v824, 0
      %v841 = vsel %vm631, %v826, 0
      %v844 = vsel %vm631, %v828, 0
      %v847 = vsel %vm644, %v832, 0
      %v850 = vsel %vm644, %v833, 0
      %852 = vmatpush.bf16.msra.mxu0 0
      %853 = vmatpush.bf16.msra.mxu0 0
      %854 = vmatpush.bf16.msra.mxu0 0
      %855 = vmatpush.bf16.msra.mxu0 0
      %856 = vmatpush.bf16.msra.mxu0 0
      %857 = vmatpush.bf16.msra.mxu0 0
      %858 = vmatpush.bf16.msra.mxu0 0
      %859 = vmatpush.bf16.msra.mxu0 %v847
      %860 = vmatmul.bf16.gmra.mxu0 %v835
      %v861 = vpop.f32.mrf.mxu0
      %v862 = vadd.f32 0.0, %v861
      %v863 = vpop.f32.mrf.mxu0
      %v864 = vadd.f32 0.0, %v863
      %865 = vmatmul.bf16.gmra.mxu0 %v838
      %v866 = vpop.f32.mrf.mxu0
      %v867 = vadd.f32 0.0, %v866
      %v868 = vpop.f32.mrf.mxu0
      %v869 = vadd.f32 0.0, %v868
      %870 = vmatmul.bf16.gmra.mxu0 %v841
      %v871 = vpop.f32.mrf.mxu0
      %v872 = vadd.f32 0.0, %v871
      %v873 = vpop.f32.mrf.mxu0
      %v874 = vadd.f32 0.0, %v873
      %875 = vmatmul.bf16.gmra.mxu0 %v844
      %v876 = vpop.f32.mrf.mxu0
      %v877 = vadd.f32 0.0, %v876
      %v878 = vpop.f32.mrf.mxu0
      %v879 = vadd.f32 0.0, %v878
      %880 = vdwg.mxu0
      %881 = vmatpush.bf16.msra.mxu0 0
      %882 = vmatpush.bf16.msra.mxu0 0
      %883 = vmatpush.bf16.msra.mxu0 0
      %884 = vmatpush.bf16.msra.mxu0 0
      %885 = vmatpush.bf16.msra.mxu0 0
      %886 = vmatpush.bf16.msra.mxu0 0
      %887 = vmatpush.bf16.msra.mxu0 0
      %888 = vmatpush.bf16.msra.mxu0 %v850
      %889 = vmatmul.bf16.gmra.mxu0 %v835
      %v890 = vpop.f32.mrf.mxu0
      %v891 = vadd.f32 0.0, %v890
      %v892 = vpop.f32.mrf.mxu0
      %v893 = vadd.f32 0.0, %v892
      %894 = vmatmul.bf16.gmra.mxu0 %v838
      %v895 = vpop.f32.mrf.mxu0
      %v896 = vadd.f32 0.0, %v895
      %v897 = vpop.f32.mrf.mxu0
      %v898 = vadd.f32 0.0, %v897
      %899 = vmatmul.bf16.gmra.mxu0 %v841
      %v900 = vpop.f32.mrf.mxu0
      %v901 = vadd.f32 0.0, %v900
      %v902 = vpop.f32.mrf.mxu0
      %v903 = vadd.f32 0.0, %v902
      %904 = vmatmul.bf16.gmra.mxu0 %v844
      %v905 = vpop.f32.mrf.mxu0
      %v906 = vadd.f32 0.0, %v905
      %v907 = vpop.f32.mrf.mxu0
      %v908 = vadd.f32 0.0, %v907
      %909 = vdwg.mxu0
      %v910 = vadd.f32 %v772, %v862
      %v911 = vadd.f32 %v801, %v891
      %v912 = vadd.f32 %v774, %v864
      %v913 = vadd.f32 %v803, %v893
      %v914 = vadd.f32 %v777, %v867
      %v915 = vadd.f32 %v806, %v896
      %v916 = vadd.f32 %v779, %v869
      %v917 = vadd.f32 %v808, %v898
      %v918 = vadd.f32 %v782, %v872
      %v919 = vadd.f32 %v811, %v901
      %v920 = vadd.f32 %v784, %v874
      %v921 = vadd.f32 %v813, %v903
      %v922 = vadd.f32 %v787, %v877
      %v923 = vadd.f32 %v816, %v906
      %v924 = vadd.f32 %v789, %v879
      %v925 = vadd.f32 %v818, %v908
      %v926 = vld [vmem:[%s5] sm:$0xff]
      %v927 = vld [vmem:[%s5 + $0x8] sm:$0xff]
      %v929 = vunpack.c.l.b16 %v492
      %v930 = vpack.c.b16 %v719, %v718
      %v931 = vpack.c.b16 %v721, %v720
      %v932 = vpack.c.b16 %v723, %v722
      %v933 = vpack.c.b16 %v929, %v724
      %v936 = vunpack.c.l.b16 %v926
      %v937 = vunpack.c.h.b16 %v926
      %v938 = vunpack.c.l.b16 %v927
      %v939 = vunpack.c.h.b16 %v927
      %v940 = vpack.c.b16 %v938, %v936
      %v941 = vpack.c.b16 %v939, %v937
      %vm944 = vcmask 130048
      %v946 = vsel %vm944, %v930, 0
      %v949 = vsel %vm944, %v931, 0
      %v952 = vsel %vm944, %v932, 0
      %v955 = vsel %vm944, %v933, 0
      %957 = vmatpush.bf16.msra.mxu0 0
      %958 = vmatpush.bf16.msra.mxu0 0
      %959 = vmatpush.bf16.msra.mxu0 0
      %960 = vmatpush.bf16.msra.mxu0 0
      %961 = vmatpush.bf16.msra.mxu0 0
      %962 = vmatpush.bf16.msra.mxu0 0
      %963 = vmatpush.bf16.msra.mxu0 0
      %964 = vmatpush.bf16.msra.mxu0 %v940
      %965 = vmatmul.bf16.gmra.mxu0 %v946
      %v966 = vpop.f32.mrf.mxu0
      %v967 = vadd.f32 0.0, %v966
      %v968 = vpop.f32.mrf.mxu0
      %v969 = vadd.f32 0.0, %v968
      %970 = vmatmul.bf16.gmra.mxu0 %v949
      %v971 = vpop.f32.mrf.mxu0
      %v972 = vadd.f32 0.0, %v971
      %v973 = vpop.f32.mrf.mxu0
      %v974 = vadd.f32 0.0, %v973
      %975 = vmatmul.bf16.gmra.mxu0 %v952
      %v976 = vpop.f32.mrf.mxu0
      %v977 = vadd.f32 0.0, %v976
      %v978 = vpop.f32.mrf.mxu0
      %v979 = vadd.f32 0.0, %v978
      %980 = vmatmul.bf16.gmra.mxu0 %v955
      %v981 = vpop.f32.mrf.mxu0
      %v982 = vadd.f32 0.0, %v981
      %v983 = vpop.f32.mrf.mxu0
      %v984 = vadd.f32 0.0, %v983
      %985 = vdwg.mxu0
      %986 = vmatpush.bf16.msra.mxu0 0
      %987 = vmatpush.bf16.msra.mxu0 0
      %988 = vmatpush.bf16.msra.mxu0 0
      %989 = vmatpush.bf16.msra.mxu0 0
      %990 = vmatpush.bf16.msra.mxu0 0
      %991 = vmatpush.bf16.msra.mxu0 0
      %992 = vmatpush.bf16.msra.mxu0 0
      %993 = vmatpush.bf16.msra.mxu0 %v941
      %994 = vmatmul.bf16.gmra.mxu0 %v946
      %v995 = vpop.f32.mrf.mxu0
      %v996 = vadd.f32 0.0, %v995
      %v997 = vpop.f32.mrf.mxu0
      %v998 = vadd.f32 0.0, %v997
      %999 = vmatmul.bf16.gmra.mxu0 %v949
      %v1000 = vpop.f32.mrf.mxu0
      %v1001 = vadd.f32 0.0, %v1000
      %v1002 = vpop.f32.mrf.mxu0
      %v1003 = vadd.f32 0.0, %v1002
      %1004 = vmatmul.bf16.gmra.mxu0 %v952
      %v1005 = vpop.f32.mrf.mxu0
      %v1006 = vadd.f32 0.0, %v1005
      %v1007 = vpop.f32.mrf.mxu0
      %v1008 = vadd.f32 0.0, %v1007
      %1009 = vmatmul.bf16.gmra.mxu0 %v955
      %v1010 = vpop.f32.mrf.mxu0
      %v1011 = vadd.f32 0.0, %v1010
      %v1012 = vpop.f32.mrf.mxu0
      %v1013 = vadd.f32 0.0, %v1012
      %1014 = vdwg.mxu0
      %v1015 = vadd.f32 %v910, %v967
      %v1016 = vadd.f32 %v911, %v996
      %v1017 = vadd.f32 %v912, %v969
      %v1018 = vadd.f32 %v913, %v998
      %v1019 = vadd.f32 %v914, %v972
      %v1020 = vadd.f32 %v915, %v1001
      %v1021 = vadd.f32 %v916, %v974
      %v1022 = vadd.f32 %v917, %v1003
      %v1023 = vadd.f32 %v918, %v977
      %v1024 = vadd.f32 %v919, %v1006
      %v1025 = vadd.f32 %v920, %v979
      %v1026 = vadd.f32 %v921, %v1008
      %v1027 = vadd.f32 %v922, %v982
      %v1028 = vadd.f32 %v923, %v1011
      %v1029 = vadd.f32 %v924, %v984
      %v1030 = vadd.f32 %v925, %v1013
      %v1032 = vshrl.u32 %v492, 16
      %v1034 = vrot.slane %v1032, 4
      %v1035 = vshll.u32 %v492, 16
      %v1037 = vrot.slane %v1035, 5
      %v1038 = vor.u32 %v1034, %v1037
      %v1039 = vrot.slane %v1038, 4
      %v1041 = vshll.u32 %v493, 16
      %v1043 = vrot.slane %v1041, 5
      %v1044 = vsel %vm500, %v1039, %v1043
      %v1045 = vld [vmem:[%s6] sm:$0xff]
      %v1046 = vunpack.c.l.b16 %v1044
      %v1047 = vpack.c.b16 %v616, %v615
      %v1048 = vpack.c.b16 %v618, %v617
      %v1049 = vpack.c.b16 %v620, %v619
      %v1050 = vpack.c.b16 %v1046, %v621
      %v1052 = vunpack.c.l.b16 %v1045
      %v1053 = vunpack.c.h.b16 %v1045
      %v1054 = vpack.c.b16 %v1052, %v1052
      %v1055 = vpack.c.b16 %v1053, %v1053
      %v1057 = vsel %vm631, %v1047, 0
      %v1060 = vsel %vm631, %v1048, 0
      %v1063 = vsel %vm631, %v1049, 0
      %v1066 = vsel %vm631, %v1050, 0
      %v1069 = vsel %vm644, %v1054, 0
      %v1072 = vsel %vm644, %v1055, 0
      %1074 = vmatpush.bf16.msra.mxu0 0
      %1075 = vmatpush.bf16.msra.mxu0 0
      %1076 = vmatpush.bf16.msra.mxu0 0
      %1077 = vmatpush.bf16.msra.mxu0 0
      %1078 = vmatpush.bf16.msra.mxu0 0
      %1079 = vmatpush.bf16.msra.mxu0 0
      %1080 = vmatpush.bf16.msra.mxu0 0
      %1081 = vmatpush.bf16.msra.mxu0 %v1069
      %1082 = vmatmul.bf16.gmra.mxu0 %v1057
      %v1083 = vpop.f32.mrf.mxu0
      %v1084 = vadd.f32 0.0, %v1083
      %v1085 = vpop.f32.mrf.mxu0
      %v1086 = vadd.f32 0.0, %v1085
      %1087 = vmatmul.bf16.gmra.mxu0 %v1060
      %v1088 = vpop.f32.mrf.mxu0
      %v1089 = vadd.f32 0.0, %v1088
      %v1090 = vpop.f32.mrf.mxu0
      %v1091 = vadd.f32 0.0, %v1090
      %1092 = vmatmul.bf16.gmra.mxu0 %v1063
      %v1093 = vpop.f32.mrf.mxu0
      %v1094 = vadd.f32 0.0, %v1093
      %v1095 = vpop.f32.mrf.mxu0
      %v1096 = vadd.f32 0.0, %v1095
      %1097 = vmatmul.bf16.gmra.mxu0 %v1066
      %v1098 = vpop.f32.mrf.mxu0
      %v1099 = vadd.f32 0.0, %v1098
      %v1100 = vpop.f32.mrf.mxu0
      %v1101 = vadd.f32 0.0, %v1100
      %1102 = vdwg.mxu0
      %1103 = vmatpush.bf16.msra.mxu0 0
      %1104 = vmatpush.bf16.msra.mxu0 0
      %1105 = vmatpush.bf16.msra.mxu0 0
      %1106 = vmatpush.bf16.msra.mxu0 0
      %1107 = vmatpush.bf16.msra.mxu0 0
      %1108 = vmatpush.bf16.msra.mxu0 0
      %1109 = vmatpush.bf16.msra.mxu0 0
      %1110 = vmatpush.bf16.msra.mxu0 %v1072
      %1111 = vmatmul.bf16.gmra.mxu0 %v1057
      %v1112 = vpop.f32.mrf.mxu0
      %v1113 = vadd.f32 0.0, %v1112
      %v1114 = vpop.f32.mrf.mxu0
      %v1115 = vadd.f32 0.0, %v1114
      %1116 = vmatmul.bf16.gmra.mxu0 %v1060
      %v1117 = vpop.f32.mrf.mxu0
      %v1118 = vadd.f32 0.0, %v1117
      %v1119 = vpop.f32.mrf.mxu0
      %v1120 = vadd.f32 0.0, %v1119
      %1121 = vmatmul.bf16.gmra.mxu0 %v1063
      %v1122 = vpop.f32.mrf.mxu0
      %v1123 = vadd.f32 0.0, %v1122
      %v1124 = vpop.f32.mrf.mxu0
      %v1125 = vadd.f32 0.0, %v1124
      %1126 = vmatmul.bf16.gmra.mxu0 %v1066
      %v1127 = vpop.f32.mrf.mxu0
      %v1128 = vadd.f32 0.0, %v1127
      %v1129 = vpop.f32.mrf.mxu0
      %v1130 = vadd.f32 0.0, %v1129
      %1131 = vdwg.mxu0
      %v1132 = vadd.f32 %v1015, %v1084
      %v1133 = vadd.f32 %v1016, %v1113
      %v1134 = vadd.f32 %v1017, %v1086
      %v1135 = vadd.f32 %v1018, %v1115
      %v1136 = vadd.f32 %v1019, %v1089
      %v1137 = vadd.f32 %v1020, %v1118
      %v1138 = vadd.f32 %v1021, %v1091
      %v1139 = vadd.f32 %v1022, %v1120
      %v1140 = vadd.f32 %v1023, %v1094
      %v1141 = vadd.f32 %v1024, %v1123
      %v1142 = vadd.f32 %v1025, %v1096
      %v1143 = vadd.f32 %v1026, %v1125
      %v1144 = vadd.f32 %v1027, %v1099
      %v1145 = vadd.f32 %v1028, %v1128
      %v1146 = vadd.f32 %v1029, %v1101
      %v1147 = vadd.f32 %v1030, %v1130
      %v1148 = vld [vmem:[%s7] sm:$0x3]
      %v1150 = vperm.slane %v1148, 0
      %v1151 = vperm.slane %v1148, 1
      %v1154 = vadd.f32 %v1132, %v1150
      %v1155 = vadd.f32 %v1133, %v1151
      %v1156 = vadd.f32 %v1134, %v1150
      %v1157 = vadd.f32 %v1135, %v1151
      %v1158 = vadd.f32 %v1136, %v1150
      %v1159 = vadd.f32 %v1137, %v1151
      %v1160 = vadd.f32 %v1138, %v1150
      %v1161 = vadd.f32 %v1139, %v1151
      %v1162 = vadd.f32 %v1140, %v1150
      %v1163 = vadd.f32 %v1141, %v1151
      %v1164 = vadd.f32 %v1142, %v1150
      %v1165 = vadd.f32 %v1143, %v1151
      %v1166 = vadd.f32 %v1144, %v1150
      %v1167 = vadd.f32 %v1145, %v1151
      %v1168 = vadd.f32 %v1146, %v1150
      %v1169 = vadd.f32 %v1147, %v1151
      %v1170 = vmax.f32 %v1154, 0.0
      %v1171 = vmax.f32 %v1155, 0.0
      %v1172 = vmax.f32 %v1156, 0.0
      %v1173 = vmax.f32 %v1157, 0.0
      %v1174 = vmax.f32 %v1158, 0.0
      %v1175 = vmax.f32 %v1159, 0.0
      %v1176 = vmax.f32 %v1160, 0.0
      %v1177 = vmax.f32 %v1161, 0.0
      %v1178 = vmax.f32 %v1162, 0.0
      %v1179 = vmax.f32 %v1163, 0.0
      %v1180 = vmax.f32 %v1164, 0.0
      %v1181 = vmax.f32 %v1165, 0.0
      %v1182 = vmax.f32 %v1166, 0.0
      %v1183 = vmax.f32 %v1167, 0.0
      %v1184 = vmax.f32 %v1168, 0.0
      %v1185 = vmax.f32 %v1169, 0.0
      %v1186 = vpack.c.bf16 %v1172, %v1170
      %v1187 = vpack.c.bf16 %v1173, %v1171
      %v1188 = vpack.c.bf16 %v1176, %v1174
      %v1189 = vpack.c.bf16 %v1177, %v1175
      %v1190 = vpack.c.bf16 %v1180, %v1178
      %v1191 = vpack.c.bf16 %v1181, %v1179
      %v1192 = vpack.c.bf16 %v1184, %v1182
      %v1193 = vpack.c.bf16 %v1185, %v1183
      %v1194 = vld [vmem:[%s8] sm:$0xf]
      %v1195 = vld [vmem:[%s8 + $0x4] sm:$0xf]
      %v1196 = vld [vmem:[%s8 + $0x8] sm:$0xf]
      %v1197 = vld [vmem:[%s8 + $0xc] sm:$0xf]
      %v1198 = vld [vmem:[%s8 + $0x10] sm:$0xf]
      %v1199 = vld [vmem:[%s8 + $0x14] sm:$0xf]
      %v1200 = vld [vmem:[%s8 + $0x18] sm:$0xf]
      %v1201 = vld [vmem:[%s8 + $0x1c] sm:$0xf]
      %v1202 = vld [vmem:[%s8 + $0x20] sm:$0xf]
      %v1203 = vld [vmem:[%s8 + $0x24] sm:$0xf]
      %v1204 = vld [vmem:[%s8 + $0x28] sm:$0xf]
      %v1205 = vld [vmem:[%s8 + $0x2c] sm:$0xf]
      %v1206 = vld [vmem:[%s8 + $0x30] sm:$0xf]
      %v1207 = vld [vmem:[%s8 + $0x34] sm:$0xf]
      %v1208 = vld [vmem:[%s8 + $0x38] sm:$0xf]
      %v1209 = vld [vmem:[%s8 + $0x3c] sm:$0xf]
      %v1210 = vld [vmem:[%s8 + $0x40] sm:$0xf]
      %v1211 = vld [vmem:[%s8 + $0x44] sm:$0xf]
      %v1212 = vld [vmem:[%s8 + $0x48] sm:$0xf]
      %v1213 = vld [vmem:[%s8 + $0x4c] sm:$0xf]
      %v1214 = vld [vmem:[%s8 + $0x50] sm:$0xf]
      %v1215 = vld [vmem:[%s8 + $0x54] sm:$0xf]
      %v1216 = vld [vmem:[%s8 + $0x58] sm:$0xf]
      %v1217 = vld [vmem:[%s8 + $0x5c] sm:$0xf]
      %v1218 = vld [vmem:[%s8 + $0x60] sm:$0xf]
      %v1219 = vld [vmem:[%s8 + $0x64] sm:$0xf]
      %v1220 = vld [vmem:[%s8 + $0x68] sm:$0xf]
      %v1221 = vld [vmem:[%s8 + $0x6c] sm:$0xf]
      %v1222 = vld [vmem:[%s8 + $0x70] sm:$0xf]
      %v1223 = vld [vmem:[%s8 + $0x74] sm:$0xf]
      %v1224 = vld [vmem:[%s8 + $0x78] sm:$0xf]
      %v1225 = vld [vmem:[%s8 + $0x7c] sm:$0xf]
      %v1226 = vld [vmem:[%s9] sm:$0x1]
      %v1228 = vperm.slane %v1226, 0
      %v1262 = vunpack.c.l.b16 %v1194
      %v1263 = vunpack.c.l.b16 %v1195
      %v1264 = vunpack.c.l.b16 %v1196
      %v1265 = vunpack.c.l.b16 %v1197
      %v1266 = vunpack.c.l.b16 %v1198
      %v1267 = vunpack.c.l.b16 %v1199
      %v1268 = vunpack.c.l.b16 %v1200
      %v1269 = vunpack.c.l.b16 %v1201
      %v1270 = vunpack.c.l.b16 %v1202
      %v1271 = vunpack.c.l.b16 %v1203
      %v1272 = vunpack.c.l.b16 %v1204
      %v1273 = vunpack.c.l.b16 %v1205
      %v1274 = vunpack.c.l.b16 %v1206
      %v1275 = vunpack.c.l.b16 %v1207
      %v1276 = vunpack.c.l.b16 %v1208
      %v1277 = vunpack.c.l.b16 %v1209
      %v1278 = vunpack.c.l.b16 %v1210
      %v1279 = vunpack.c.l.b16 %v1211
      %v1280 = vunpack.c.l.b16 %v1212
      %v1281 = vunpack.c.l.b16 %v1213
      %v1282 = vunpack.c.l.b16 %v1214
      %v1283 = vunpack.c.l.b16 %v1215
      %v1284 = vunpack.c.l.b16 %v1216
      %v1285 = vunpack.c.l.b16 %v1217
      %v1286 = vunpack.c.l.b16 %v1218
      %v1287 = vunpack.c.l.b16 %v1219
      %v1288 = vunpack.c.l.b16 %v1220
      %v1289 = vunpack.c.l.b16 %v1221
      %v1290 = vunpack.c.l.b16 %v1222
      %v1291 = vunpack.c.l.b16 %v1223
      %v1292 = vunpack.c.l.b16 %v1224
      %v1293 = vunpack.c.l.b16 %v1225
      %v1294 = vpack.c.b16 %v1263, %v1262
      %v1295 = vpack.c.b16 %v1265, %v1264
      %v1296 = vpack.c.b16 %v1267, %v1266
      %v1297 = vpack.c.b16 %v1269, %v1268
      %v1298 = vpack.c.b16 %v1271, %v1270
      %v1299 = vpack.c.b16 %v1273, %v1272
      %v1300 = vpack.c.b16 %v1275, %v1274
      %v1301 = vpack.c.b16 %v1277, %v1276
      %v1302 = vpack.c.b16 %v1279, %v1278
      %v1303 = vpack.c.b16 %v1281, %v1280
      %v1304 = vpack.c.b16 %v1283, %v1282
      %v1305 = vpack.c.b16 %v1285, %v1284
      %v1306 = vpack.c.b16 %v1287, %v1286
      %v1307 = vpack.c.b16 %v1289, %v1288
      %v1308 = vpack.c.b16 %v1291, %v1290
      %v1309 = vpack.c.b16 %v1293, %v1292
      %1326 = vmatpush.bf16.msra.mxu0 %v1301
      %1327 = vmatpush.bf16.msra.mxu0 %v1300
      %1328 = vmatpush.bf16.msra.mxu0 %v1299
      %1329 = vmatpush.bf16.msra.mxu0 %v1298
      %1330 = vmatpush.bf16.msra.mxu0 %v1297
      %1331 = vmatpush.bf16.msra.mxu0 %v1296
      %1332 = vmatpush.bf16.msra.mxu0 %v1295
      %1333 = vmatpush.bf16.msra.mxu0 %v1294
      %1334 = vmatmul.bf16.gmra.mxu0 %v1186
      %v1335 = vpop.f32.mrf.mxu0
      %v1336 = vadd.f32 %v1228, %v1335
      %v1337 = vpop.f32.mrf.mxu0
      %v1338 = vadd.f32 %v1228, %v1337
      %1339 = vmatmul.bf16.gmra.mxu0 %v1188
      %v1340 = vpop.f32.mrf.mxu0
      %v1341 = vadd.f32 %v1228, %v1340
      %v1342 = vpop.f32.mrf.mxu0
      %v1343 = vadd.f32 %v1228, %v1342
      %1344 = vmatmul.bf16.gmra.mxu0 %v1190
      %v1345 = vpop.f32.mrf.mxu0
      %v1346 = vadd.f32 %v1228, %v1345
      %v1347 = vpop.f32.mrf.mxu0
      %v1348 = vadd.f32 %v1228, %v1347
      %1349 = vmatmul.bf16.gmra.mxu0 %v1192
      %v1350 = vpop.f32.mrf.mxu0
      %v1351 = vadd.f32 %v1228, %v1350
      %v1352 = vpop.f32.mrf.mxu0
      %v1353 = vadd.f32 %v1228, %v1352
      %1354 = vdwg.mxu0
      %1355 = vmatpush.bf16.msra.mxu0 %v1309
      %1356 = vmatpush.bf16.msra.mxu0 %v1308
      %1357 = vmatpush.bf16.msra.mxu0 %v1307
      %1358 = vmatpush.bf16.msra.mxu0 %v1306
      %1359 = vmatpush.bf16.msra.mxu0 %v1305
      %1360 = vmatpush.bf16.msra.mxu0 %v1304
      %1361 = vmatpush.bf16.msra.mxu0 %v1303
      %1362 = vmatpush.bf16.msra.mxu0 %v1302
      %1363 = vmatmul.bf16.gmra.mxu0 %v1187
      %v1364 = vpop.f32.mrf.mxu0
      %v1365 = vadd.f32 %v1336, %v1364
      %v1366 = vpop.f32.mrf.mxu0
      %v1367 = vadd.f32 %v1338, %v1366
      %1368 = vmatmul.bf16.gmra.mxu0 %v1189
      %v1369 = vpop.f32.mrf.mxu0
      %v1370 = vadd.f32 %v1341, %v1369
      %v1371 = vpop.f32.mrf.mxu0
      %v1372 = vadd.f32 %v1343, %v1371
      %1373 = vmatmul.bf16.gmra.mxu0 %v1191
      %v1374 = vpop.f32.mrf.mxu0
      %v1375 = vadd.f32 %v1346, %v1374
      %v1376 = vpop.f32.mrf.mxu0
      %v1377 = vadd.f32 %v1348, %v1376
      %1378 = vmatmul.bf16.gmra.mxu0 %v1193
      %v1379 = vpop.f32.mrf.mxu0
      %v1380 = vadd.f32 %v1351, %v1379
      %v1381 = vpop.f32.mrf.mxu0
      %v1382 = vadd.f32 %v1353, %v1381
      %1383 = vdwg.mxu0
      %1384 = vst [vmem:[%s473] sm:$0xff] %v1365
      %1385 = vst [vmem:[%s473 + $0x8] sm:$0xff] %v1367
      %1386 = vst [vmem:[%s473 + $0x10] sm:$0xff] %v1370
      %1387 = vst [vmem:[%s473 + $0x18] sm:$0xff] %v1372
      %1388 = vst [vmem:[%s473 + $0x20] sm:$0xff] %v1375
      %1389 = vst [vmem:[%s473 + $0x28] sm:$0xff] %v1377
      %1390 = vst [vmem:[%s473 + $0x30] sm:$0xff] %v1380
      %1391 = vst [vmem:[%s473 + $0x38] sm:$0xff] %v1382
      %s1392 = smul.u32 8, %s26
      %p1393 = scmp.lt.s32.totalorder %s25, 1
      %s1394 = scalar_select %p1393, %s25, 1
      %p1395 = scmp.lt.s32.totalorder %s1392, 7
      %s1396 = scalar_select %p1395, %s1392, 7
      %s1397 = smul.addr %s1394, 8
      %s1398 = sadd.s32 %s1396, %s1397
      %s1399 = smul.addr %s1398, 8
      %s1400 = scalar_lea.vmem %s10, %s1399
      // Predicated region
      $region61: #{superpoint_decoder_forward.1} parent=59 // pred_check
        %p1401 = pneg %p281
      $region62: #{superpoint_decoder_forward.1} parent=59 // pred_check_branch
        %1403 = sbr.rel (%p1401) target = $region64
      $region63: #{superpoint_decoder_forward.1} parent=59 // pred_region
        %s1404 = smul.u32 8, %s26
      $region64: #{superpoint_decoder_forward.1} parent=59 // pred_fallthru
        _
    $region60: #{superpoint_decoder_forward.1} parent=5 // pred_fallthru
      _
    %p1405 = scmp.le.s32.totalorder 2, %s16
    // Predicated region
    $region65: #{superpoint_decoder_forward.1} parent=5 // pred_check
      %p1406 = pneg %p1405
    $region66: #{superpoint_decoder_forward.1} parent=5 // pred_check_branch
      %1408 = sbr.rel (%p1406) target = $region68
    $region67: #{superpoint_decoder_forward.1} parent=5 // pred_region
      %s1409 = ssub.s32 %s16, 2
      // Predicated region
      $region69: #{superpoint_decoder_forward.1} parent=67 // pred_check
        %p1410 = pneg %p287
      $region70: #{superpoint_decoder_forward.1} parent=67 // pred_check_branch
        %1412 = sbr.rel (%p1410) target = $region72
      $region71: #{superpoint_decoder_forward.1} parent=67 // pred_region
        %s1413 = smul.u32 8, %s28
        %p1414 = scmp.lt.s32.totalorder %s27, 1
        %s1415 = scalar_select %p1414, %s27, 1
        %p1416 = scmp.lt.s32.totalorder %s1413, 7
        %s1417 = scalar_select %p1416, %s1413, 7
        %s1418 = smul.addr %s1415, 8
        %s1419 = sadd.s32 %s1417, %s1418
        %s1420 = smul.addr %s1419, 8
        %s1421 = scalar_lea.vmem %s10, %s1420
      $region72: #{superpoint_decoder_forward.1} parent=67 // pred_fallthru
        _
    $region68: #{superpoint_decoder_forward.1} parent=5 // pred_fallthru
      _
  $region6: #{superpoint_decoder_forward.1} parent=0 // loop_footer
    %s20 = sadd.s32 1, %s16
  $region7: #{superpoint_decoder_forward.1} parent=0 // loop_footer_branch
    %15 = sbr.rel target = $region3
  $region8: #{superpoint_decoder_forward.1} parent=0 // loop_exit
    _

</llo_original>
